<compile_context>
chip_gen: v5e
topology: v5e:2x2
jax: 0.10.0
libtpu: 0.0.40
codegen_flags: <defaults>
</compile_context>

<pallas_src>
import functools

import jax
import jax.numpy as jnp
from jax import lax
from jax.experimental import pallas as pl
from jax.experimental.pallas import tpu as pltpu

_GATE_PERM = (0, 1, 3, 2)   # PyTorch gate order (i, f, g, o) -> kernel (i, f, o, g)
_LANE = 128                 # lane tile
_SUBLANE = 8                # f32 sublane tile


def _round_up(x, m):
    return (x + m - 1) // m * m


# ----------------------------------------------------------------------------
# Pallas kernel: one (batch_block, time_chunk) grid step of a single LSTM layer
# ----------------------------------------------------------------------------
def lstm_layer_kernel(x_ref, wih_ref, whh_ref, b_ref, y_ref,
                      gx_scr, h_scr, c_scr, *, n_sub):
    """Grid = (batch_blocks, time_chunks); time is the inner, sequential axis,
    so h_scr / c_scr carry the recurrent state between consecutive time chunks
    of the same batch block.

    x_ref   : (CT, BB, Din)    bf16 input chunk (time-major)
    wih_ref : (Din, 4H)        bf16 input->gates weights, gate order (i, f, o, g)
    whh_ref : (H,   4H)        bf16 hidden->gates weights, gate order (i, f, o, g)
    b_ref   : (1,   4H)        f32 combined bias (b_ih + b_hh), same gate order
    y_ref   : (CT, BB, H)      bf16 per-step hidden outputs
    gx_scr  : (CT, BB, 4H)     f32 VMEM scratch for the hoisted input projection
    h_scr   : (BB, H)          f32 recurrent hidden state (VMEM scratch)
    c_scr   : (BB, H)          f32 recurrent cell state   (VMEM scratch)
    n_sub   : static number of independent batch sub-blocks interleaved per step
    """
    ct, bb, din = x_ref.shape
    hid = y_ref.shape[-1]
    h4 = wih_ref.shape[-1]

    @pl.when(pl.program_id(1) == 0)          # first time chunk of this batch block
    def _init_state():
        h_scr[...] = jnp.zeros_like(h_scr)
        c_scr[...] = jnp.zeros_like(c_scr)

    wih = wih_ref[...]
    whh = whh_ref[...]
    bias = b_ref[...]

    # Hoisted input projection: one MXU GEMM (+ one bias broadcast) for the
    # whole chunk, written to VMEM scratch so only one step stays live later.
    x2d = x_ref[...].reshape(ct * bb, din)                      # already bf16
    gx = jnp.dot(x2d, wih, preferred_element_type=jnp.float32) + bias
    gx_scr[...] = gx.reshape(ct, bb, h4)

    sub = bb // n_sub

    def step(t):
        gx_t = gx_scr[t]                                        # (BB, 4H) f32
        for s in range(n_sub):                                  # independent recurrences
            rows = pl.ds(s * sub, sub)                          # static start
            h_prev = h_scr[rows, :].astype(whh.dtype)
            gates = gx_t[s * sub:(s + 1) * sub, :] + jnp.dot(
                h_prev, whh, preferred_element_type=jnp.float32)
            # sigmoid(x) = 0.5 * tanh(0.5 * x) + 0.5  -> single EUP pass
            ifo = 0.5 * jnp.tanh(0.5 * gates[:, :3 * hid]) + 0.5
            g_g = jnp.tanh(gates[:, 3 * hid:])
            i_g = ifo[:, 0 * hid:1 * hid]
            f_g = ifo[:, 1 * hid:2 * hid]
            o_g = ifo[:, 2 * hid:3 * hid]
            c_new = f_g * c_scr[rows, :] + i_g * g_g
            h_new = o_g * jnp.tanh(c_new)
            c_scr[rows, :] = c_new
            h_scr[rows, :] = h_new
        y_ref[t] = h_scr[...].astype(y_ref.dtype)               # lane-dense (BB, H) store

    if ct <= 8:
        for t in range(ct):                                     # short static trip count
            step(t)
    else:
        def body(t, carry):
            step(t)
            return carry
        lax.fori_loop(0, ct, body, 0, unroll=2)


def lstm_layer(x_tbd, w_ih, w_hh, b, *, block_t, block_b, n_sub=1,
               out_skip_chunks=0, out_dtype=jnp.bfloat16):
    """Run one LSTM layer over a padded, time-major (T, B, Din) sequence.

    out_skip_chunks > 0 (last layer only) aliases the first `out_skip_chunks`
    time chunks onto output block 0 (overwritten in VMEM), so only the tail
    chunks the fc actually consumes reach HBM.
    """
    t_tot, b_tot, d_in = x_tbd.shape
    hid, h4 = w_hh.shape
    assert t_tot % block_t == 0 and b_tot % block_b == 0
    assert block_b % n_sub == 0
    n_b = b_tot // block_b
    n_t = t_tot // block_t
    out_skip_chunks = min(out_skip_chunks, n_t - 1)
    out_t = (n_t - out_skip_chunks) * block_t

    if out_skip_chunks:
        def y_map(bb, tt):
            return (jnp.maximum(tt - out_skip_chunks, 0), bb, 0)
    else:
        def y_map(bb, tt):
            return (tt, bb, 0)

    # VMEM budget: double-buffered x/y blocks + double-buffered resident
    # weights + gx/h/c scratch; derive the scoped limit from it.
    x_item = jnp.dtype(x_tbd.dtype).itemsize
    y_item = jnp.dtype(out_dtype).itemsize
    vmem_bytes = (
        2 * block_t * block_b * d_in * x_item
        + 2 * block_t * block_b * hid * y_item
        + 2 * ((d_in + hid) * h4 * 2 + h4 * 4)
        + block_t * block_b * h4 * 4
        + 2 * block_b * hid * 4
    )
    vmem_limit = int(min(max(vmem_bytes * 3 // 2, 32 * 1024 * 1024),
                         96 * 1024 * 1024))

    kernel = functools.partial(lstm_layer_kernel, n_sub=n_sub)
    return pl.pallas_call(
        kernel,
        out_shape=jax.ShapeDtypeStruct((out_t, b_tot, hid), out_dtype),
        grid_spec=pltpu.PrefetchScalarGridSpec(
            num_scalar_prefetch=0,
            grid=(n_b, n_t),                     # batch outer, time inner (sequential)
            in_specs=[
                pl.BlockSpec((block_t, block_b, d_in), lambda bb, tt: (tt, bb, 0)),
                pl.BlockSpec((d_in, h4), lambda bb, tt: (0, 0)),   # resident weights
                pl.BlockSpec((hid, h4), lambda bb, tt: (0, 0)),    # resident weights
                pl.BlockSpec((1, h4), lambda bb, tt: (0, 0)),      # resident bias
            ],
            out_specs=pl.BlockSpec((block_t, block_b, hid), y_map),
            scratch_shapes=[
                pltpu.VMEM((block_t, block_b, h4), jnp.float32),   # gx
                pltpu.VMEM((block_b, hid), jnp.float32),           # h
                pltpu.VMEM((block_b, hid), jnp.float32),           # c
            ],
        ),
        compiler_params=pltpu.CompilerParams(
            dimension_semantics=("parallel", "arbitrary"),
            vmem_limit_bytes=vmem_limit,
        ),
    )(x_tbd, w_ih, w_hh, b)


# ----------------------------------------------------------------------------
# Parameters (PyTorch layout) and kernel-side packing
# ----------------------------------------------------------------------------
def init_params(key, input_size, hidden_size, num_layers):
    """PyTorch-shaped params: w_ih (4H, in), w_hh (4H, H), biases (4H,),
    fc (1, H)/(1,), init U(-1/sqrt(H), 1/sqrt(H)) like nn.LSTM / nn.Linear."""
    k = 1.0 / (hidden_size ** 0.5)
    layers = []
    for layer in range(num_layers):
        in_l = input_size if layer == 0 else hidden_size
        key, k1, k2, k3, k4 = jax.random.split(key, 5)
        layers.append(dict(
            w_ih=jax.random.uniform(k1, (4 * hidden_size, in_l), jnp.float32, -k, k),
            w_hh=jax.random.uniform(k2, (4 * hidden_size, hidden_size), jnp.float32, -k, k),
            b_ih=jax.random.uniform(k3, (4 * hidden_size,), jnp.float32, -k, k),
            b_hh=jax.random.uniform(k4, (4 * hidden_size,), jnp.float32, -k, k),
        ))
    key, k5, k6 = jax.random.split(key, 3)
    fc_w = jax.random.uniform(k5, (1, hidden_size), jnp.float32, -k, k)
    fc_b = jax.random.uniform(k6, (1,), jnp.float32, -k, k)
    return dict(layers=layers, fc_w=fc_w, fc_b=fc_b,
                input_size=input_size, hidden_size=hidden_size)


def _pack_gate_weight(w, in_dim, in_pad, hid, hid_pad, dtype):
    """(4H, in) PyTorch layout (i,f,g,o) -> (in_pad, 4*hid_pad) in (i,f,o,g).
    Padded rows/columns are exactly zero (required by the padded-lane invariant)."""
    g = w.reshape(4, hid, in_dim)[jnp.asarray(_GATE_PERM)]   # reorder gates
    g = jnp.transpose(g, (2, 0, 1))                          # (in, 4, H)
    g = jnp.pad(g, ((0, in_pad - in_dim), (0, 0), (0, hid_pad - hid)))
    return g.reshape(in_pad, 4 * hid_pad).astype(dtype)


def _pack_gate_bias(b, hid, hid_pad):
    g = b.reshape(4, hid)[jnp.asarray(_GATE_PERM)]
    g = jnp.pad(g, ((0, 0), (0, hid_pad - hid)))             # padded bias = 0 (invariant)
    return g.reshape(1, 4 * hid_pad).astype(jnp.float32)


def prepare_params(params, matmul_dtype=jnp.bfloat16):
    """Permute / pad / cast the PyTorch-layout params for the Pallas kernel."""
    hid = params["hidden_size"]
    d_in = params["input_size"]
    hid_pad = _round_up(hid, _LANE)
    d_pad = _round_up(d_in, _LANE)
    layers = []
    for idx, lp in enumerate(params["layers"]):
        in_dim, in_pad = (d_in, d_pad) if idx == 0 else (hid, hid_pad)
        layers.append((
            _pack_gate_weight(lp["w_ih"], in_dim, in_pad, hid, hid_pad, matmul_dtype),
            _pack_gate_weight(lp["w_hh"], hid, hid_pad, hid, hid_pad, matmul_dtype),
            _pack_gate_bias(lp["b_ih"] + lp["b_hh"], hid, hid_pad),
        ))
    return dict(layers=layers,
                fc_w=params["fc_w"].T.astype(jnp.float32),   # (H, 1)
                fc_b=params["fc_b"].astype(jnp.float32),     # (1,)
                hid=hid, hid_pad=hid_pad, d_in=d_in, d_pad=d_pad)


# ----------------------------------------------------------------------------
# Model forward (equivalent of LSTM.forward)
# ----------------------------------------------------------------------------
def lstm_model_forward(x, prep, pre_len, *, block_t=8, block_b=128):
    """x: (B, T, input_size) -> (B, pre_len, 1)."""
    b, t, d = x.shape
    hid, d_pad = prep["hid"], prep["d_pad"]
    assert 1 <= pre_len <= t

    # Batch blocking: sublane-aligned; if the whole (padded) batch would fit a
    # single block, split it in two so the "parallel" batch axis can feed both
    # v7x TensorCores (no effect on single-TC v5e/v6e).
    b8 = _round_up(b, _SUBLANE)
    blk_b = _round_up(min(block_b, b8), _SUBLANE)
    if b8 >= 2 * _SUBLANE and b8 <= blk_b:
        blk_b = _round_up((b8 + 1) // 2, _SUBLANE)
    b_pad = _round_up(b8, blk_b)
    # Two interleaved sub-recurrences per kernel instance when each half is
    # still sublane-aligned.
    n_sub = 2 if (blk_b % (2 * _SUBLANE) == 0 and blk_b >= 2 * _SUBLANE) else 1

    blk_t = max(1, min(block_t, t))
    t_pad = _round_up(t, blk_t)
    n_t = t_pad // blk_t
    # Last layer: only the chunks covering the last pre_len real steps matter.
    skip = min(max((t - pre_len) // blk_t, 0), n_t - 1)

    # time-major, bf16 activations, zero-padded to hardware-friendly shapes
    # (extra timesteps are at the end and do not affect earlier outputs).
    xt = jnp.transpose(x, (1, 0, 2)).astype(jnp.bfloat16)
    xt = jnp.pad(xt, ((0, t_pad - t), (0, b_pad - b), (0, d_pad - d)))

    seq = xt
    n_layers = len(prep["layers"])
    for li, (w_ih, w_hh, bias) in enumerate(prep["layers"]):
        last = li == n_layers - 1
        seq = lstm_layer(seq, w_ih, w_hh, bias, block_t=blk_t, block_b=blk_b,
                         n_sub=n_sub, out_skip_chunks=skip if last else 0)

    # fc epilogue on the last pre_len real steps — plain XLA (a standalone
    # pallas_call with a 1-wide output would just be masked stores + overhead).
    start = t - pre_len - skip * blk_t
    tail = seq[start:start + pre_len, :b, :hid].astype(jnp.float32)  # (pre_len, B, H)
    out = jnp.einsum("tbh,ho->tbo", tail, prep["fc_w"]) + prep["fc_b"]
    return jnp.transpose(out, (1, 0, 2))                             # (B, pre_len, 1)


# ----------------------------------------------------------------------------
# Pure-JAX reference (independent: raw PyTorch layout, standard i,f,g,o order;
# matmul inputs rounded to bf16 to mirror the kernel's MXU precision and the
# kernel's bf16 activation storage).
# ----------------------------------------------------------------------------
def lstm_model_reference(x, params, pre_len, matmul_dtype=jnp.bfloat16):
    b, t, _ = x.shape
    hid = params["hidden_size"]

    def q(a):
        return a.astype(matmul_dtype).astype(jnp.float32)

    seq = x
    for lp in params["layers"]:
        w_ih = q(lp["w_ih"].T)
        w_hh = q(lp["w_hh"].T)
        bias = (lp["b_ih"] + lp["b_hh"])[None, :]
        h = jnp.zeros((b, hid), jnp.float32)
        c = jnp.zeros((b, hid), jnp.float32)
        outs = []
        for step in range(t):
            gates = q(seq[:, step, :]) @ w_ih + q(h) @ w_hh + bias
            i = jax.nn.sigmoid(gates[:, 0 * hid:1 * hid])
            f = jax.nn.sigmoid(gates[:, 1 * hid:2 * hid])
            g = jnp.tanh(gates[:, 2 * hid:3 * hid])
            o = jax.nn.sigmoid(gates[:, 3 * hid:4 * hid])
            c = f * c + i * g
            h = o * jnp.tanh(c)
            outs.append(h)
        seq = jnp.stack(outs, axis=1)
    tail = q(seq[:, -pre_len:, :])        # kernel stores inter-layer h in bf16
    return jnp.einsum("bth,ho->bto", tail, params["fc_w"].T) + params["fc_b"]


if __name__ == "__main__":
    input_size, hidden_size, num_layers, pre_len = 4, 32, 2, 3
    batch, seq_len = 2, 8

    key = jax.random.PRNGKey(0)
    key, pkey, xkey = jax.random.split(key, 3)
    params = init_params(pkey, input_size, hidden_size, num_layers)
    x = jax.random.normal(xkey, (batch, seq_len, input_size), jnp.float32)

    prep = prepare_params(params)
    # block_t=4 over T=8 -> 2 time chunks per layer, exercising both the
    # scratch-carried recurrent state across grid steps and the tail-only
    # (out_skip_chunks) output path of the final layer.
    fwd = jax.jit(lambda xx: lstm_model_forward(xx, prep, pre_len,
                                                block_t=4, block_b=8))
    out = jax.block_until_ready(fwd(x))

    ref = lstm_model_reference(x, params, pre_len)
    assert out.shape == (batch, pre_len, 1), out.shape
    err = float(jnp.max(jnp.abs(out - ref)))
    assert err < 3e-3, f"max abs err {err}"
    print("KERNEL_OK")
</pallas_src>

<mosaic_0001>
module attributes {stable_mosaic.version = 11 : i64} {
  func.func @lstm_layer_kernel(%arg0: i32, %arg1: i32, %arg2: memref<4x8x128xbf16, #tpu.memory_space<vmem>>, %arg3: memref<128x512xbf16, #tpu.memory_space<vmem>>, %arg4: memref<128x512xbf16, #tpu.memory_space<vmem>>, %arg5: memref<1x512xf32, #tpu.memory_space<vmem>>, %arg6: memref<4x8x128xbf16, #tpu.memory_space<vmem>>, %arg7: memref<4x8x512xf32, #tpu.memory_space<vmem>>, %arg8: memref<8x128xf32, #tpu.memory_space<vmem>>, %arg9: memref<8x128xf32, #tpu.memory_space<vmem>>) attributes {dimension_semantics = [#tpu.dimension_semantics<parallel>, #tpu.dimension_semantics<arbitrary>], iteration_bounds = array<i64: 1, 2>, scalar_prefetch = 0 : i64, scratch_operands = 3 : i64, tpu.core_type = #tpu.core_type<tc>, window_params = [{transform_indices = @transform_0, window_bounds = array<i64: 4, 8, 128>}, {pipeline_mode = #tpu.pipeline_mode<synchronous>, transform_indices = @transform_1, window_bounds = array<i64: 128, 512>}, {pipeline_mode = #tpu.pipeline_mode<synchronous>, transform_indices = @transform_2, window_bounds = array<i64: 128, 512>}, {pipeline_mode = #tpu.pipeline_mode<synchronous>, transform_indices = @transform_3, window_bounds = array<i64: 1, 512>}, {transform_indices = @transform_4, window_bounds = array<i64: 4, 8, 128>}]} {
    %c0_i32 = arith.constant 0 : i32
    %0 = arith.cmpi eq, %arg1, %c0_i32 : i32
    %1 = arith.extui %0 : i1 to i32
    %c0_i32_0 = arith.constant 0 : i32
    %2 = arith.cmpi ne, %1, %c0_i32_0 : i32
    scf.if %2 {
      %cst_89 = arith.constant 0.000000e+00 : f32
      %141 = vector.broadcast %cst_89 : f32 to vector<8x128xf32>
      %c0_90 = arith.constant 0 : index
      %c0_91 = arith.constant 0 : index
      %142 = vector.load %arg8[%c0_90, %c0_91] : memref<8x128xf32, #tpu.memory_space<vmem>>, vector<8x128xf32>
      tpu.vector_store %arg8[%c0_90, %c0_91], %141 {strides = array<i32>} : memref<8x128xf32, #tpu.memory_space<vmem>>, vector<8x128xf32>,
      %cst_92 = arith.constant 0.000000e+00 : f32
      %143 = vector.broadcast %cst_92 : f32 to vector<8x128xf32>
      %c0_93 = arith.constant 0 : index
      %c0_94 = arith.constant 0 : index
      %144 = vector.load %arg9[%c0_93, %c0_94] : memref<8x128xf32, #tpu.memory_space<vmem>>, vector<8x128xf32>
      tpu.vector_store %arg9[%c0_93, %c0_94], %143 {strides = array<i32>} : memref<8x128xf32, #tpu.memory_space<vmem>>, vector<8x128xf32>,
    } else {
    }
    %c0 = arith.constant 0 : index
    %c0_1 = arith.constant 0 : index
    %3 = vector.load %arg3[%c0, %c0_1] : memref<128x512xbf16, #tpu.memory_space<vmem>>, vector<128x512xbf16>
    %c0_2 = arith.constant 0 : index
    %c0_3 = arith.constant 0 : index
    %4 = vector.load %arg4[%c0_2, %c0_3] : memref<128x512xbf16, #tpu.memory_space<vmem>>, vector<128x512xbf16>
    %c0_4 = arith.constant 0 : index
    %c0_5 = arith.constant 0 : index
    %5 = vector.load %arg5[%c0_4, %c0_5] : memref<1x512xf32, #tpu.memory_space<vmem>>, vector<1x512xf32>
    %c0_6 = arith.constant 0 : index
    %c0_7 = arith.constant 0 : index
    %c0_8 = arith.constant 0 : index
    %6 = vector.load %arg2[%c0_6, %c0_7, %c0_8] : memref<4x8x128xbf16, #tpu.memory_space<vmem>>, vector<4x8x128xbf16>
    %7 = vector.shape_cast %6 : vector<4x8x128xbf16> to vector<32x128xbf16>
    %cst = arith.constant dense<0.000000e+00> : vector<32x512xf32>
    %8 = tpu.matmul %7, %3, %cst {dimension_numbers = #tpu.dot_dimension_numbers<[1], [0], [0], [1], [0, 0, 1, 1], [], []>} : vector<32x128xbf16>, vector<128x512xbf16>, vector<32x512xf32> -> vector<32x512xf32>
    %9 = vector.broadcast %5 : vector<1x512xf32> to vector<32x512xf32>
    %10 = arith.addf %8, %9 : vector<32x512xf32>
    %11 = vector.shape_cast %10 : vector<32x512xf32> to vector<4x8x512xf32>
    %c0_9 = arith.constant 0 : index
    %c0_10 = arith.constant 0 : index
    %c0_11 = arith.constant 0 : index
    %12 = vector.load %arg7[%c0_9, %c0_10, %c0_11] : memref<4x8x512xf32, #tpu.memory_space<vmem>>, vector<4x8x512xf32>
    tpu.vector_store %arg7[%c0_9, %c0_10, %c0_11], %11 {strides = array<i32>} : memref<4x8x512xf32, #tpu.memory_space<vmem>>, vector<4x8x512xf32>,
    %c0_12 = arith.constant 0 : index
    %c0_13 = arith.constant 0 : index
    %c0_14 = arith.constant 0 : index
    %13 = vector.load %arg7[%c0_12, %c0_13, %c0_14] : memref<4x8x512xf32, #tpu.memory_space<vmem>>, vector<1x8x512xf32>
    %14 = vector.shape_cast %13 : vector<1x8x512xf32> to vector<8x512xf32>
    %c0_15 = arith.constant 0 : index
    %c0_16 = arith.constant 0 : index
    %15 = vector.load %arg8[%c0_15, %c0_16] : memref<8x128xf32, #tpu.memory_space<vmem>>, vector<8x128xf32>
    %16 = arith.truncf %15 : vector<8x128xf32> to vector<8x128xbf16>
    %cst_17 = arith.constant dense<0.000000e+00> : vector<8x512xf32>
    %17 = tpu.matmul %16, %4, %cst_17 {dimension_numbers = #tpu.dot_dimension_numbers<[1], [0], [0], [1], [0, 0, 1, 1], [], []>} : vector<8x128xbf16>, vector<128x512xbf16>, vector<8x512xf32> -> vector<8x512xf32>
    %18 = arith.addf %14, %17 : vector<8x512xf32>
    %19 = vector.extract_strided_slice %18 {offsets = [0, 0], sizes = [8, 384], strides = [1, 1]} : vector<8x512xf32> to vector<8x384xf32>
    %cst_18 = arith.constant 5.000000e-01 : f32
    %20 = vector.broadcast %cst_18 : f32 to vector<8x384xf32>
    %21 = arith.mulf %20, %19 : vector<8x384xf32>
    %22 = math.tanh %21 : vector<8x384xf32>
    %cst_19 = arith.constant 5.000000e-01 : f32
    %23 = vector.broadcast %cst_19 : f32 to vector<8x384xf32>
    %24 = arith.mulf %23, %22 : vector<8x384xf32>
    %cst_20 = arith.constant 5.000000e-01 : f32
    %25 = vector.broadcast %cst_20 : f32 to vector<8x384xf32>
    %26 = arith.addf %24, %25 : vector<8x384xf32>
    %27 = vector.extract_strided_slice %18 {offsets = [0, 384], sizes = [8, 128], strides = [1, 1]} : vector<8x512xf32> to vector<8x128xf32>
    %28 = math.tanh %27 : vector<8x128xf32>
    %29 = vector.extract_strided_slice %26 {offsets = [0, 0], sizes = [8, 128], strides = [1, 1]} : vector<8x384xf32> to vector<8x128xf32>
    %30 = vector.extract_strided_slice %26 {offsets = [0, 128], sizes = [8, 128], strides = [1, 1]} : vector<8x384xf32> to vector<8x128xf32>
    %31 = vector.extract_strided_slice %26 {offsets = [0, 256], sizes = [8, 128], strides = [1, 1]} : vector<8x384xf32> to vector<8x128xf32>
    %c0_21 = arith.constant 0 : index
    %c0_22 = arith.constant 0 : index
    %32 = vector.load %arg9[%c0_21, %c0_22] : memref<8x128xf32, #tpu.memory_space<vmem>>, vector<8x128xf32>
    %33 = arith.mulf %30, %32 : vector<8x128xf32>
    %34 = arith.mulf %29, %28 : vector<8x128xf32>
    %35 = arith.addf %33, %34 : vector<8x128xf32>
    %36 = math.tanh %35 : vector<8x128xf32>
    %37 = arith.mulf %31, %36 : vector<8x128xf32>
    %c0_23 = arith.constant 0 : index
    %c0_24 = arith.constant 0 : index
    %38 = vector.load %arg9[%c0_23, %c0_24] : memref<8x128xf32, #tpu.memory_space<vmem>>, vector<8x128xf32>
    tpu.vector_store %arg9[%c0_23, %c0_24], %35 {strides = array<i32>} : memref<8x128xf32, #tpu.memory_space<vmem>>, vector<8x128xf32>,
    %c0_25 = arith.constant 0 : index
    %c0_26 = arith.constant 0 : index
    %39 = vector.load %arg8[%c0_25, %c0_26] : memref<8x128xf32, #tpu.memory_space<vmem>>, vector<8x128xf32>
    tpu.vector_store %arg8[%c0_25, %c0_26], %37 {strides = array<i32>} : memref<8x128xf32, #tpu.memory_space<vmem>>, vector<8x128xf32>,
    %c0_27 = arith.constant 0 : index
    %c0_28 = arith.constant 0 : index
    %40 = vector.load %arg8[%c0_27, %c0_28] : memref<8x128xf32, #tpu.memory_space<vmem>>, vector<8x128xf32>
    %41 = arith.truncf %40 : vector<8x128xf32> to vector<8x128xbf16>
    %c0_29 = arith.constant 0 : index
    %c0_30 = arith.constant 0 : index
    %c0_31 = arith.constant 0 : index
    %42 = vector.load %arg6[%c0_29, %c0_30, %c0_31] : memref<4x8x128xbf16, #tpu.memory_space<vmem>>, vector<1x8x128xbf16>
    %43 = vector.shape_cast %42 : vector<1x8x128xbf16> to vector<8x128xbf16>
    %44 = vector.shape_cast %41 : vector<8x128xbf16> to vector<1x8x128xbf16>
    tpu.vector_store %arg6[%c0_29, %c0_30, %c0_31], %44 {strides = array<i32>} : memref<4x8x128xbf16, #tpu.memory_space<vmem>>, vector<1x8x128xbf16>,
    %c1 = arith.constant 1 : index
    %c0_32 = arith.constant 0 : index
    %c0_33 = arith.constant 0 : index
    %45 = vector.load %arg7[%c1, %c0_32, %c0_33] : memref<4x8x512xf32, #tpu.memory_space<vmem>>, vector<1x8x512xf32>
    %46 = vector.shape_cast %45 : vector<1x8x512xf32> to vector<8x512xf32>
    %c0_34 = arith.constant 0 : index
    %c0_35 = arith.constant 0 : index
    %47 = vector.load %arg8[%c0_34, %c0_35] : memref<8x128xf32, #tpu.memory_space<vmem>>, vector<8x128xf32>
    %48 = arith.truncf %47 : vector<8x128xf32> to vector<8x128xbf16>
    %cst_36 = arith.constant dense<0.000000e+00> : vector<8x512xf32>
    %49 = tpu.matmul %48, %4, %cst_36 {dimension_numbers = #tpu.dot_dimension_numbers<[1], [0], [0], [1], [0, 0, 1, 1], [], []>} : vector<8x128xbf16>, vector<128x512xbf16>, vector<8x512xf32> -> vector<8x512xf32>
    %50 = arith.addf %46, %49 : vector<8x512xf32>
    %51 = vector.extract_strided_slice %50 {offsets = [0, 0], sizes = [8, 384], strides = [1, 1]} : vector<8x512xf32> to vector<8x384xf32>
    %cst_37 = arith.constant 5.000000e-01 : f32
    %52 = vector.broadcast %cst_37 : f32 to vector<8x384xf32>
    %53 = arith.mulf %52, %51 : vector<8x384xf32>
    %54 = math.tanh %53 : vector<8x384xf32>
    %cst_38 = arith.constant 5.000000e-01 : f32
    %55 = vector.broadcast %cst_38 : f32 to vector<8x384xf32>
    %56 = arith.mulf %55, %54 : vector<8x384xf32>
    %cst_39 = arith.constant 5.000000e-01 : f32
    %57 = vector.broadcast %cst_39 : f32 to vector<8x384xf32>
    %58 = arith.addf %56, %57 : vector<8x384xf32>
    %59 = vector.extract_strided_slice %50 {offsets = [0, 384], sizes = [8, 128], strides = [1, 1]} : vector<8x512xf32> to vector<8x128xf32>
    %60 = math.tanh %59 : vector<8x128xf32>
    %61 = vector.extract_strided_slice %58 {offsets = [0, 0], sizes = [8, 128], strides = [1, 1]} : vector<8x384xf32> to vector<8x128xf32>
    %62 = vector.extract_strided_slice %58 {offsets = [0, 128], sizes = [8, 128], strides = [1, 1]} : vector<8x384xf32> to vector<8x128xf32>
    %63 = vector.extract_strided_slice %58 {offsets = [0, 256], sizes = [8, 128], strides = [1, 1]} : vector<8x384xf32> to vector<8x128xf32>
    %c0_40 = arith.constant 0 : index
    %c0_41 = arith.constant 0 : index
    %64 = vector.load %arg9[%c0_40, %c0_41] : memref<8x128xf32, #tpu.memory_space<vmem>>, vector<8x128xf32>
    %65 = arith.mulf %62, %64 : vector<8x128xf32>
    %66 = arith.mulf %61, %60 : vector<8x128xf32>
    %67 = arith.addf %65, %66 : vector<8x128xf32>
    %68 = math.tanh %67 : vector<8x128xf32>
    %69 = arith.mulf %63, %68 : vector<8x128xf32>
    %c0_42 = arith.constant 0 : index
    %c0_43 = arith.constant 0 : index
    %70 = vector.load %arg9[%c0_42, %c0_43] : memref<8x128xf32, #tpu.memory_space<vmem>>, vector<8x128xf32>
    tpu.vector_store %arg9[%c0_42, %c0_43], %67 {strides = array<i32>} : memref<8x128xf32, #tpu.memory_space<vmem>>, vector<8x128xf32>,
    %c0_44 = arith.constant 0 : index
    %c0_45 = arith.constant 0 : index
    %71 = vector.load %arg8[%c0_44, %c0_45] : memref<8x128xf32, #tpu.memory_space<vmem>>, vector<8x128xf32>
    tpu.vector_store %arg8[%c0_44, %c0_45], %69 {strides = array<i32>} : memref<8x128xf32, #tpu.memory_space<vmem>>, vector<8x128xf32>,
    %c0_46 = arith.constant 0 : index
    %c0_47 = arith.constant 0 : index
    %72 = vector.load %arg8[%c0_46, %c0_47] : memref<8x128xf32, #tpu.memory_space<vmem>>, vector<8x128xf32>
    %73 = arith.truncf %72 : vector<8x128xf32> to vector<8x128xbf16>
    %c1_48 = arith.constant 1 : index
    %c0_49 = arith.constant 0 : index
    %c0_50 = arith.constant 0 : index
    %74 = vector.load %arg6[%c1_48, %c0_49, %c0_50] : memref<4x8x128xbf16, #tpu.memory_space<vmem>>, vector<1x8x128xbf16>
    %75 = vector.shape_cast %74 : vector<1x8x128xbf16> to vector<8x128xbf16>
    %76 = vector.shape_cast %73 : vector<8x128xbf16> to vector<1x8x128xbf16>
    tpu.vector_store %arg6[%c1_48, %c0_49, %c0_50], %76 {strides = array<i32>} : memref<4x8x128xbf16, #tpu.memory_space<vmem>>, vector<1x8x128xbf16>,
    %c2 = arith.constant 2 : index
    %c0_51 = arith.constant 0 : index
    %c0_52 = arith.constant 0 : index
    %77 = vector.load %arg7[%c2, %c0_51, %c0_52] : memref<4x8x512xf32, #tpu.memory_space<vmem>>, vector<1x8x512xf32>
    %78 = vector.shape_cast %77 : vector<1x8x512xf32> to vector<8x512xf32>
    %c0_53 = arith.constant 0 : index
    %c0_54 = arith.constant 0 : index
    %79 = vector.load %arg8[%c0_53, %c0_54] : memref<8x128xf32, #tpu.memory_space<vmem>>, vector<8x128xf32>
    %80 = arith.truncf %79 : vector<8x128xf32> to vector<8x128xbf16>
    %cst_55 = arith.constant dense<0.000000e+00> : vector<8x512xf32>
    %81 = tpu.matmul %80, %4, %cst_55 {dimension_numbers = #tpu.dot_dimension_numbers<[1], [0], [0], [1], [0, 0, 1, 1], [], []>} : vector<8x128xbf16>, vector<128x512xbf16>, vector<8x512xf32> -> vector<8x512xf32>
    %82 = arith.addf %78, %81 : vector<8x512xf32>
    %83 = vector.extract_strided_slice %82 {offsets = [0, 0], sizes = [8, 384], strides = [1, 1]} : vector<8x512xf32> to vector<8x384xf32>
    %cst_56 = arith.constant 5.000000e-01 : f32
    %84 = vector.broadcast %cst_56 : f32 to vector<8x384xf32>
    %85 = arith.mulf %84, %83 : vector<8x384xf32>
    %86 = math.tanh %85 : vector<8x384xf32>
    %cst_57 = arith.constant 5.000000e-01 : f32
    %87 = vector.broadcast %cst_57 : f32 to vector<8x384xf32>
    %88 = arith.mulf %87, %86 : vector<8x384xf32>
    %cst_58 = arith.constant 5.000000e-01 : f32
    %89 = vector.broadcast %cst_58 : f32 to vector<8x384xf32>
    %90 = arith.addf %88, %89 : vector<8x384xf32>
    %91 = vector.extract_strided_slice %82 {offsets = [0, 384], sizes = [8, 128], strides = [1, 1]} : vector<8x512xf32> to vector<8x128xf32>
    %92 = math.tanh %91 : vector<8x128xf32>
    %93 = vector.extract_strided_slice %90 {offsets = [0, 0], sizes = [8, 128], strides = [1, 1]} : vector<8x384xf32> to vector<8x128xf32>
    %94 = vector.extract_strided_slice %90 {offsets = [0, 128], sizes = [8, 128], strides = [1, 1]} : vector<8x384xf32> to vector<8x128xf32>
    %95 = vector.extract_strided_slice %90 {offsets = [0, 256], sizes = [8, 128], strides = [1, 1]} : vector<8x384xf32> to vector<8x128xf32>
    %c0_59 = arith.constant 0 : index
    %c0_60 = arith.constant 0 : index
    %96 = vector.load %arg9[%c0_59, %c0_60] : memref<8x128xf32, #tpu.memory_space<vmem>>, vector<8x128xf32>
    %97 = arith.mulf %94, %96 : vector<8x128xf32>
    %98 = arith.mulf %93, %92 : vector<8x128xf32>
    %99 = arith.addf %97, %98 : vector<8x128xf32>
    %100 = math.tanh %99 : vector<8x128xf32>
    %101 = arith.mulf %95, %100 : vector<8x128xf32>
    %c0_61 = arith.constant 0 : index
    %c0_62 = arith.constant 0 : index
    %102 = vector.load %arg9[%c0_61, %c0_62] : memref<8x128xf32, #tpu.memory_space<vmem>>, vector<8x128xf32>
    tpu.vector_store %arg9[%c0_61, %c0_62], %99 {strides = array<i32>} : memref<8x128xf32, #tpu.memory_space<vmem>>, vector<8x128xf32>,
    %c0_63 = arith.constant 0 : index
    %c0_64 = arith.constant 0 : index
    %103 = vector.load %arg8[%c0_63, %c0_64] : memref<8x128xf32, #tpu.memory_space<vmem>>, vector<8x128xf32>
    tpu.vector_store %arg8[%c0_63, %c0_64], %101 {strides = array<i32>} : memref<8x128xf32, #tpu.memory_space<vmem>>, vector<8x128xf32>,
    %c0_65 = arith.constant 0 : index
    %c0_66 = arith.constant 0 : index
    %104 = vector.load %arg8[%c0_65, %c0_66] : memref<8x128xf32, #tpu.memory_space<vmem>>, vector<8x128xf32>
    %105 = arith.truncf %104 : vector<8x128xf32> to vector<8x128xbf16>
    %c2_67 = arith.constant 2 : index
    %c0_68 = arith.constant 0 : index
    %c0_69 = arith.constant 0 : index
    %106 = vector.load %arg6[%c2_67, %c0_68, %c0_69] : memref<4x8x128xbf16, #tpu.memory_space<vmem>>, vector<1x8x128xbf16>
    %107 = vector.shape_cast %106 : vector<1x8x128xbf16> to vector<8x128xbf16>
    %108 = vector.shape_cast %105 : vector<8x128xbf16> to vector<1x8x128xbf16>
    tpu.vector_store %arg6[%c2_67, %c0_68, %c0_69], %108 {strides = array<i32>} : memref<4x8x128xbf16, #tpu.memory_space<vmem>>, vector<1x8x128xbf16>,
    %c3 = arith.constant 3 : index
    %c0_70 = arith.constant 0 : index
    %c0_71 = arith.constant 0 : index
    %109 = vector.load %arg7[%c3, %c0_70, %c0_71] : memref<4x8x512xf32, #tpu.memory_space<vmem>>, vector<1x8x512xf32>
    %110 = vector.shape_cast %109 : vector<1x8x512xf32> to vector<8x512xf32>
    %c0_72 = arith.constant 0 : index
    %c0_73 = arith.constant 0 : index
    %111 = vector.load %arg8[%c0_72, %c0_73] : memref<8x128xf32, #tpu.memory_space<vmem>>, vector<8x128xf32>
    %112 = arith.truncf %111 : vector<8x128xf32> to vector<8x128xbf16>
    %cst_74 = arith.constant dense<0.000000e+00> : vector<8x512xf32>
    %113 = tpu.matmul %112, %4, %cst_74 {dimension_numbers = #tpu.dot_dimension_numbers<[1], [0], [0], [1], [0, 0, 1, 1], [], []>} : vector<8x128xbf16>, vector<128x512xbf16>, vector<8x512xf32> -> vector<8x512xf32>
    %114 = arith.addf %110, %113 : vector<8x512xf32>
    %115 = vector.extract_strided_slice %114 {offsets = [0, 0], sizes = [8, 384], strides = [1, 1]} : vector<8x512xf32> to vector<8x384xf32>
    %cst_75 = arith.constant 5.000000e-01 : f32
    %116 = vector.broadcast %cst_75 : f32 to vector<8x384xf32>
    %117 = arith.mulf %116, %115 : vector<8x384xf32>
    %118 = math.tanh %117 : vector<8x384xf32>
    %cst_76 = arith.constant 5.000000e-01 : f32
    %119 = vector.broadcast %cst_76 : f32 to vector<8x384xf32>
    %120 = arith.mulf %119, %118 : vector<8x384xf32>
    %cst_77 = arith.constant 5.000000e-01 : f32
    %121 = vector.broadcast %cst_77 : f32 to vector<8x384xf32>
    %122 = arith.addf %120, %121 : vector<8x384xf32>
    %123 = vector.extract_strided_slice %114 {offsets = [0, 384], sizes = [8, 128], strides = [1, 1]} : vector<8x512xf32> to vector<8x128xf32>
    %124 = math.tanh %123 : vector<8x128xf32>
    %125 = vector.extract_strided_slice %122 {offsets = [0, 0], sizes = [8, 128], strides = [1, 1]} : vector<8x384xf32> to vector<8x128xf32>
    %126 = vector.extract_strided_slice %122 {offsets = [0, 128], sizes = [8, 128], strides = [1, 1]} : vector<8x384xf32> to vector<8x128xf32>
    %127 = vector.extract_strided_slice %122 {offsets = [0, 256], sizes = [8, 128], strides = [1, 1]} : vector<8x384xf32> to vector<8x128xf32>
    %c0_78 = arith.constant 0 : index
    %c0_79 = arith.constant 0 : index
    %128 = vector.load %arg9[%c0_78, %c0_79] : memref<8x128xf32, #tpu.memory_space<vmem>>, vector<8x128xf32>
    %129 = arith.mulf %126, %128 : vector<8x128xf32>
    %130 = arith.mulf %125, %124 : vector<8x128xf32>
    %131 = arith.addf %129, %130 : vector<8x128xf32>
    %132 = math.tanh %131 : vector<8x128xf32>
    %133 = arith.mulf %127, %132 : vector<8x128xf32>
    %c0_80 = arith.constant 0 : index
    %c0_81 = arith.constant 0 : index
    %134 = vector.load %arg9[%c0_80, %c0_81] : memref<8x128xf32, #tpu.memory_space<vmem>>, vector<8x128xf32>
    tpu.vector_store %arg9[%c0_80, %c0_81], %131 {strides = array<i32>} : memref<8x128xf32, #tpu.memory_space<vmem>>, vector<8x128xf32>,
    %c0_82 = arith.constant 0 : index
    %c0_83 = arith.constant 0 : index
    %135 = vector.load %arg8[%c0_82, %c0_83] : memref<8x128xf32, #tpu.memory_space<vmem>>, vector<8x128xf32>
    tpu.vector_store %arg8[%c0_82, %c0_83], %133 {strides = array<i32>} : memref<8x128xf32, #tpu.memory_space<vmem>>, vector<8x128xf32>,
    %c0_84 = arith.constant 0 : index
    %c0_85 = arith.constant 0 : index
    %136 = vector.load %arg8[%c0_84, %c0_85] : memref<8x128xf32, #tpu.memory_space<vmem>>, vector<8x128xf32>
    %137 = arith.truncf %136 : vector<8x128xf32> to vector<8x128xbf16>
    %c3_86 = arith.constant 3 : index
    %c0_87 = arith.constant 0 : index
    %c0_88 = arith.constant 0 : index
    %138 = vector.load %arg6[%c3_86, %c0_87, %c0_88] : memref<4x8x128xbf16, #tpu.memory_space<vmem>>, vector<1x8x128xbf16>
    %139 = vector.shape_cast %138 : vector<1x8x128xbf16> to vector<8x128xbf16>
    %140 = vector.shape_cast %137 : vector<8x128xbf16> to vector<1x8x128xbf16>
    tpu.vector_store %arg6[%c3_86, %c0_87, %c0_88], %140 {strides = array<i32>} : memref<4x8x128xbf16, #tpu.memory_space<vmem>>, vector<1x8x128xbf16>,
    return
  }
  func.func @transform_0(%arg0: i32, %arg1: i32) -> (i32, i32, i32) {
    %c0_i32 = arith.constant 0 : i32
    %c0_i32_0 = arith.constant 0 : i32
    return %arg1, %arg0, %c0_i32 : i32, i32, i32
  }
  func.func @transform_1(%arg0: i32, %arg1: i32) -> (i32, i32) {
    %c0_i32 = arith.constant 0 : i32
    %c0_i32_0 = arith.constant 0 : i32
    %c0_i32_1 = arith.constant 0 : i32
    return %c0_i32, %c0_i32_0 : i32, i32
  }
  func.func @transform_2(%arg0: i32, %arg1: i32) -> (i32, i32) {
    %c0_i32 = arith.constant 0 : i32
    %c0_i32_0 = arith.constant 0 : i32
    %c0_i32_1 = arith.constant 0 : i32
    return %c0_i32, %c0_i32_0 : i32, i32
  }
  func.func @transform_3(%arg0: i32, %arg1: i32) -> (i32, i32) {
    %c0_i32 = arith.constant 0 : i32
    %c0_i32_0 = arith.constant 0 : i32
    %c0_i32_1 = arith.constant 0 : i32
    return %c0_i32, %c0_i32_0 : i32, i32
  }
  func.func @transform_4(%arg0: i32, %arg1: i32) -> (i32, i32, i32) {
    %c0_i32 = arith.constant 0 : i32
    %c0_i32_0 = arith.constant 0 : i32
    return %arg1, %arg0, %c0_i32 : i32, i32, i32
  }
}

module attributes {stable_mosaic.version = 11 : i64} {
  func.func @lstm_layer_kernel(%arg0: i32, %arg1: i32, %arg2: memref<4x8x128xbf16, #tpu.memory_space<vmem>>, %arg3: memref<128x512xbf16, #tpu.memory_space<vmem>>, %arg4: memref<128x512xbf16, #tpu.memory_space<vmem>>, %arg5: memref<1x512xf32, #tpu.memory_space<vmem>>, %arg6: memref<4x8x128xbf16, #tpu.memory_space<vmem>>, %arg7: memref<4x8x512xf32, #tpu.memory_space<vmem>>, %arg8: memref<8x128xf32, #tpu.memory_space<vmem>>, %arg9: memref<8x128xf32, #tpu.memory_space<vmem>>) attributes {dimension_semantics = [#tpu.dimension_semantics<parallel>, #tpu.dimension_semantics<arbitrary>], iteration_bounds = array<i64: 1, 2>, scalar_prefetch = 0 : i64, scratch_operands = 3 : i64, tpu.core_type = #tpu.core_type<tc>, window_params = [{transform_indices = @transform_0, window_bounds = array<i64: 4, 8, 128>}, {pipeline_mode = #tpu.pipeline_mode<synchronous>, transform_indices = @transform_1, window_bounds = array<i64: 128, 512>}, {pipeline_mode = #tpu.pipeline_mode<synchronous>, transform_indices = @transform_2, window_bounds = array<i64: 128, 512>}, {pipeline_mode = #tpu.pipeline_mode<synchronous>, transform_indices = @transform_3, window_bounds = array<i64: 1, 512>}, {transform_indices = @transform_4, window_bounds = array<i64: 4, 8, 128>}]} {
    %c0_i32 = arith.constant 0 : i32
    %0 = arith.cmpi eq, %arg1, %c0_i32 : i32
    %1 = arith.extui %0 : i1 to i32
    %c0_i32_0 = arith.constant 0 : i32
    %2 = arith.cmpi ne, %1, %c0_i32_0 : i32
    scf.if %2 {
      %cst_89 = arith.constant 0.000000e+00 : f32
      %141 = vector.broadcast %cst_89 : f32 to vector<8x128xf32>
      %c0_90 = arith.constant 0 : index
      %c0_91 = arith.constant 0 : index
      %142 = vector.load %arg8[%c0_90, %c0_91] : memref<8x128xf32, #tpu.memory_space<vmem>>, vector<8x128xf32>
      tpu.vector_store %arg8[%c0_90, %c0_91], %141 {strides = array<i32>} : memref<8x128xf32, #tpu.memory_space<vmem>>, vector<8x128xf32>,
      %cst_92 = arith.constant 0.000000e+00 : f32
      %143 = vector.broadcast %cst_92 : f32 to vector<8x128xf32>
      %c0_93 = arith.constant 0 : index
      %c0_94 = arith.constant 0 : index
      %144 = vector.load %arg9[%c0_93, %c0_94] : memref<8x128xf32, #tpu.memory_space<vmem>>, vector<8x128xf32>
      tpu.vector_store %arg9[%c0_93, %c0_94], %143 {strides = array<i32>} : memref<8x128xf32, #tpu.memory_space<vmem>>, vector<8x128xf32>,
    } else {
    }
    %c0 = arith.constant 0 : index
    %c0_1 = arith.constant 0 : index
    %3 = vector.load %arg3[%c0, %c0_1] : memref<128x512xbf16, #tpu.memory_space<vmem>>, vector<128x512xbf16>
    %c0_2 = arith.constant 0 : index
    %c0_3 = arith.constant 0 : index
    %4 = vector.load %arg4[%c0_2, %c0_3] : memref<128x512xbf16, #tpu.memory_space<vmem>>, vector<128x512xbf16>
    %c0_4 = arith.constant 0 : index
    %c0_5 = arith.constant 0 : index
    %5 = vector.load %arg5[%c0_4, %c0_5] : memref<1x512xf32, #tpu.memory_space<vmem>>, vector<1x512xf32>
    %c0_6 = arith.constant 0 : index
    %c0_7 = arith.constant 0 : index
    %c0_8 = arith.constant 0 : index
    %6 = vector.load %arg2[%c0_6, %c0_7, %c0_8] : memref<4x8x128xbf16, #tpu.memory_space<vmem>>, vector<4x8x128xbf16>
    %7 = vector.shape_cast %6 : vector<4x8x128xbf16> to vector<32x128xbf16>
    %cst = arith.constant dense<0.000000e+00> : vector<32x512xf32>
    %8 = tpu.matmul %7, %3, %cst {dimension_numbers = #tpu.dot_dimension_numbers<[1], [0], [0], [1], [0, 0, 1, 1], [], []>} : vector<32x128xbf16>, vector<128x512xbf16>, vector<32x512xf32> -> vector<32x512xf32>
    %9 = vector.broadcast %5 : vector<1x512xf32> to vector<32x512xf32>
    %10 = arith.addf %8, %9 : vector<32x512xf32>
    %11 = vector.shape_cast %10 : vector<32x512xf32> to vector<4x8x512xf32>
    %c0_9 = arith.constant 0 : index
    %c0_10 = arith.constant 0 : index
    %c0_11 = arith.constant 0 : index
    %12 = vector.load %arg7[%c0_9, %c0_10, %c0_11] : memref<4x8x512xf32, #tpu.memory_space<vmem>>, vector<4x8x512xf32>
    tpu.vector_store %arg7[%c0_9, %c0_10, %c0_11], %11 {strides = array<i32>} : memref<4x8x512xf32, #tpu.memory_space<vmem>>, vector<4x8x512xf32>,
    %c0_12 = arith.constant 0 : index
    %c0_13 = arith.constant 0 : index
    %c0_14 = arith.constant 0 : index
    %13 = vector.load %arg7[%c0_12, %c0_13, %c0_14] : memref<4x8x512xf32, #tpu.memory_space<vmem>>, vector<1x8x512xf32>
    %14 = vector.shape_cast %13 : vector<1x8x512xf32> to vector<8x512xf32>
    %c0_15 = arith.constant 0 : index
    %c0_16 = arith.constant 0 : index
    %15 = vector.load %arg8[%c0_15, %c0_16] : memref<8x128xf32, #tpu.memory_space<vmem>>, vector<8x128xf32>
    %16 = arith.truncf %15 : vector<8x128xf32> to vector<8x128xbf16>
    %cst_17 = arith.constant dense<0.000000e+00> : vector<8x512xf32>
    %17 = tpu.matmul %16, %4, %cst_17 {dimension_numbers = #tpu.dot_dimension_numbers<[1], [0], [0], [1], [0, 0, 1, 1], [], []>} : vector<8x128xbf16>, vector<128x512xbf16>, vector<8x512xf32> -> vector<8x512xf32>
    %18 = arith.addf %14, %17 : vector<8x512xf32>
    %19 = vector.extract_strided_slice %18 {offsets = [0, 0], sizes = [8, 384], strides = [1, 1]} : vector<8x512xf32> to vector<8x384xf32>
    %cst_18 = arith.constant 5.000000e-01 : f32
    %20 = vector.broadcast %cst_18 : f32 to vector<8x384xf32>
    %21 = arith.mulf %20, %19 : vector<8x384xf32>
    %22 = math.tanh %21 : vector<8x384xf32>
    %cst_19 = arith.constant 5.000000e-01 : f32
    %23 = vector.broadcast %cst_19 : f32 to vector<8x384xf32>
    %24 = arith.mulf %23, %22 : vector<8x384xf32>
    %cst_20 = arith.constant 5.000000e-01 : f32
    %25 = vector.broadcast %cst_20 : f32 to vector<8x384xf32>
    %26 = arith.addf %24, %25 : vector<8x384xf32>
    %27 = vector.extract_strided_slice %18 {offsets = [0, 384], sizes = [8, 128], strides = [1, 1]} : vector<8x512xf32> to vector<8x128xf32>
    %28 = math.tanh %27 : vector<8x128xf32>
    %29 = vector.extract_strided_slice %26 {offsets = [0, 0], sizes = [8, 128], strides = [1, 1]} : vector<8x384xf32> to vector<8x128xf32>
    %30 = vector.extract_strided_slice %26 {offsets = [0, 128], sizes = [8, 128], strides = [1, 1]} : vector<8x384xf32> to vector<8x128xf32>
    %31 = vector.extract_strided_slice %26 {offsets = [0, 256], sizes = [8, 128], strides = [1, 1]} : vector<8x384xf32> to vector<8x128xf32>
    %c0_21 = arith.constant 0 : index
    %c0_22 = arith.constant 0 : index
    %32 = vector.load %arg9[%c0_21, %c0_22] : memref<8x128xf32, #tpu.memory_space<vmem>>, vector<8x128xf32>
    %33 = arith.mulf %30, %32 : vector<8x128xf32>
    %34 = arith.mulf %29, %28 : vector<8x128xf32>
    %35 = arith.addf %33, %34 : vector<8x128xf32>
    %36 = math.tanh %35 : vector<8x128xf32>
    %37 = arith.mulf %31, %36 : vector<8x128xf32>
    %c0_23 = arith.constant 0 : index
    %c0_24 = arith.constant 0 : index
    %38 = vector.load %arg9[%c0_23, %c0_24] : memref<8x128xf32, #tpu.memory_space<vmem>>, vector<8x128xf32>
    tpu.vector_store %arg9[%c0_23, %c0_24], %35 {strides = array<i32>} : memref<8x128xf32, #tpu.memory_space<vmem>>, vector<8x128xf32>,
    %c0_25 = arith.constant 0 : index
    %c0_26 = arith.constant 0 : index
    %39 = vector.load %arg8[%c0_25, %c0_26] : memref<8x128xf32, #tpu.memory_space<vmem>>, vector<8x128xf32>
    tpu.vector_store %arg8[%c0_25, %c0_26], %37 {strides = array<i32>} : memref<8x128xf32, #tpu.memory_space<vmem>>, vector<8x128xf32>,
    %c0_27 = arith.constant 0 : index
    %c0_28 = arith.constant 0 : index
    %40 = vector.load %arg8[%c0_27, %c0_28] : memref<8x128xf32, #tpu.memory_space<vmem>>, vector<8x128xf32>
    %41 = arith.truncf %40 : vector<8x128xf32> to vector<8x128xbf16>
    %c0_29 = arith.constant 0 : index
    %c0_30 = arith.constant 0 : index
    %c0_31 = arith.constant 0 : index
    %42 = vector.load %arg6[%c0_29, %c0_30, %c0_31] : memref<4x8x128xbf16, #tpu.memory_space<vmem>>, vector<1x8x128xbf16>
    %43 = vector.shape_cast %42 : vector<1x8x128xbf16> to vector<8x128xbf16>
    %44 = vector.shape_cast %41 : vector<8x128xbf16> to vector<1x8x128xbf16>
    tpu.vector_store %arg6[%c0_29, %c0_30, %c0_31], %44 {strides = array<i32>} : memref<4x8x128xbf16, #tpu.memory_space<vmem>>, vector<1x8x128xbf16>,
    %c1 = arith.constant 1 : index
    %c0_32 = arith.constant 0 : index
    %c0_33 = arith.constant 0 : index
    %45 = vector.load %arg7[%c1, %c0_32, %c0_33] : memref<4x8x512xf32, #tpu.memory_space<vmem>>, vector<1x8x512xf32>
    %46 = vector.shape_cast %45 : vector<1x8x512xf32> to vector<8x512xf32>
    %c0_34 = arith.constant 0 : index
    %c0_35 = arith.constant 0 : index
    %47 = vector.load %arg8[%c0_34, %c0_35] : memref<8x128xf32, #tpu.memory_space<vmem>>, vector<8x128xf32>
    %48 = arith.truncf %47 : vector<8x128xf32> to vector<8x128xbf16>
    %cst_36 = arith.constant dense<0.000000e+00> : vector<8x512xf32>
    %49 = tpu.matmul %48, %4, %cst_36 {dimension_numbers = #tpu.dot_dimension_numbers<[1], [0], [0], [1], [0, 0, 1, 1], [], []>} : vector<8x128xbf16>, vector<128x512xbf16>, vector<8x512xf32> -> vector<8x512xf32>
    %50 = arith.addf %46, %49 : vector<8x512xf32>
    %51 = vector.extract_strided_slice %50 {offsets = [0, 0], sizes = [8, 384], strides = [1, 1]} : vector<8x512xf32> to vector<8x384xf32>
    %cst_37 = arith.constant 5.000000e-01 : f32
    %52 = vector.broadcast %cst_37 : f32 to vector<8x384xf32>
    %53 = arith.mulf %52, %51 : vector<8x384xf32>
    %54 = math.tanh %53 : vector<8x384xf32>
    %cst_38 = arith.constant 5.000000e-01 : f32
    %55 = vector.broadcast %cst_38 : f32 to vector<8x384xf32>
    %56 = arith.mulf %55, %54 : vector<8x384xf32>
    %cst_39 = arith.constant 5.000000e-01 : f32
    %57 = vector.broadcast %cst_39 : f32 to vector<8x384xf32>
    %58 = arith.addf %56, %57 : vector<8x384xf32>
    %59 = vector.extract_strided_slice %50 {offsets = [0, 384], sizes = [8, 128], strides = [1, 1]} : vector<8x512xf32> to vector<8x128xf32>
    %60 = math.tanh %59 : vector<8x128xf32>
    %61 = vector.extract_strided_slice %58 {offsets = [0, 0], sizes = [8, 128], strides = [1, 1]} : vector<8x384xf32> to vector<8x128xf32>
    %62 = vector.extract_strided_slice %58 {offsets = [0, 128], sizes = [8, 128], strides = [1, 1]} : vector<8x384xf32> to vector<8x128xf32>
    %63 = vector.extract_strided_slice %58 {offsets = [0, 256], sizes = [8, 128], strides = [1, 1]} : vector<8x384xf32> to vector<8x128xf32>
    %c0_40 = arith.constant 0 : index
    %c0_41 = arith.constant 0 : index
    %64 = vector.load %arg9[%c0_40, %c0_41] : memref<8x128xf32, #tpu.memory_space<vmem>>, vector<8x128xf32>
    %65 = arith.mulf %62, %64 : vector<8x128xf32>
    %66 = arith.mulf %61, %60 : vector<8x128xf32>
    %67 = arith.addf %65, %66 : vector<8x128xf32>
    %68 = math.tanh %67 : vector<8x128xf32>
    %69 = arith.mulf %63, %68 : vector<8x128xf32>
    %c0_42 = arith.constant 0 : index
    %c0_43 = arith.constant 0 : index
    %70 = vector.load %arg9[%c0_42, %c0_43] : memref<8x128xf32, #tpu.memory_space<vmem>>, vector<8x128xf32>
    tpu.vector_store %arg9[%c0_42, %c0_43], %67 {strides = array<i32>} : memref<8x128xf32, #tpu.memory_space<vmem>>, vector<8x128xf32>,
    %c0_44 = arith.constant 0 : index
    %c0_45 = arith.constant 0 : index
    %71 = vector.load %arg8[%c0_44, %c0_45] : memref<8x128xf32, #tpu.memory_space<vmem>>, vector<8x128xf32>
    tpu.vector_store %arg8[%c0_44, %c0_45], %69 {strides = array<i32>} : memref<8x128xf32, #tpu.memory_space<vmem>>, vector<8x128xf32>,
    %c0_46 = arith.constant 0 : index
    %c0_47 = arith.constant 0 : index
    %72 = vector.load %arg8[%c0_46, %c0_47] : memref<8x128xf32, #tpu.memory_space<vmem>>, vector<8x128xf32>
    %73 = arith.truncf %72 : vector<8x128xf32> to vector<8x128xbf16>
    %c1_48 = arith.constant 1 : index
    %c0_49 = arith.constant 0 : index
    %c0_50 = arith.constant 0 : index
    %74 = vector.load %arg6[%c1_48, %c0_49, %c0_50] : memref<4x8x128xbf16, #tpu.memory_space<vmem>>, vector<1x8x128xbf16>
    %75 = vector.shape_cast %74 : vector<1x8x128xbf16> to vector<8x128xbf16>
    %76 = vector.shape_cast %73 : vector<8x128xbf16> to vector<1x8x128xbf16>
    tpu.vector_store %arg6[%c1_48, %c0_49, %c0_50], %76 {strides = array<i32>} : memref<4x8x128xbf16, #tpu.memory_space<vmem>>, vector<1x8x128xbf16>,
    %c2 = arith.constant 2 : index
    %c0_51 = arith.constant 0 : index
    %c0_52 = arith.constant 0 : index
    %77 = vector.load %arg7[%c2, %c0_51, %c0_52] : memref<4x8x512xf32, #tpu.memory_space<vmem>>, vector<1x8x512xf32>
    %78 = vector.shape_cast %77 : vector<1x8x512xf32> to vector<8x512xf32>
    %c0_53 = arith.constant 0 : index
    %c0_54 = arith.constant 0 : index
    %79 = vector.load %arg8[%c0_53, %c0_54] : memref<8x128xf32, #tpu.memory_space<vmem>>, vector<8x128xf32>
    %80 = arith.truncf %79 : vector<8x128xf32> to vector<8x128xbf16>
    %cst_55 = arith.constant dense<0.000000e+00> : vector<8x512xf32>
    %81 = tpu.matmul %80, %4, %cst_55 {dimension_numbers = #tpu.dot_dimension_numbers<[1], [0], [0], [1], [0, 0, 1, 1], [], []>} : vector<8x128xbf16>, vector<128x512xbf16>, vector<8x512xf32> -> vector<8x512xf32>
    %82 = arith.addf %78, %81 : vector<8x512xf32>
    %83 = vector.extract_strided_slice %82 {offsets = [0, 0], sizes = [8, 384], strides = [1, 1]} : vector<8x512xf32> to vector<8x384xf32>
    %cst_56 = arith.constant 5.000000e-01 : f32
    %84 = vector.broadcast %cst_56 : f32 to vector<8x384xf32>
    %85 = arith.mulf %84, %83 : vector<8x384xf32>
    %86 = math.tanh %85 : vector<8x384xf32>
    %cst_57 = arith.constant 5.000000e-01 : f32
    %87 = vector.broadcast %cst_57 : f32 to vector<8x384xf32>
    %88 = arith.mulf %87, %86 : vector<8x384xf32>
    %cst_58 = arith.constant 5.000000e-01 : f32
    %89 = vector.broadcast %cst_58 : f32 to vector<8x384xf32>
    %90 = arith.addf %88, %89 : vector<8x384xf32>
    %91 = vector.extract_strided_slice %82 {offsets = [0, 384], sizes = [8, 128], strides = [1, 1]} : vector<8x512xf32> to vector<8x128xf32>
    %92 = math.tanh %91 : vector<8x128xf32>
    %93 = vector.extract_strided_slice %90 {offsets = [0, 0], sizes = [8, 128], strides = [1, 1]} : vector<8x384xf32> to vector<8x128xf32>
    %94 = vector.extract_strided_slice %90 {offsets = [0, 128], sizes = [8, 128], strides = [1, 1]} : vector<8x384xf32> to vector<8x128xf32>
    %95 = vector.extract_strided_slice %90 {offsets = [0, 256], sizes = [8, 128], strides = [1, 1]} : vector<8x384xf32> to vector<8x128xf32>
    %c0_59 = arith.constant 0 : index
    %c0_60 = arith.constant 0 : index
    %96 = vector.load %arg9[%c0_59, %c0_60] : memref<8x128xf32, #tpu.memory_space<vmem>>, vector<8x128xf32>
    %97 = arith.mulf %94, %96 : vector<8x128xf32>
    %98 = arith.mulf %93, %92 : vector<8x128xf32>
    %99 = arith.addf %97, %98 : vector<8x128xf32>
    %100 = math.tanh %99 : vector<8x128xf32>
    %101 = arith.mulf %95, %100 : vector<8x128xf32>
    %c0_61 = arith.constant 0 : index
    %c0_62 = arith.constant 0 : index
    %102 = vector.load %arg9[%c0_61, %c0_62] : memref<8x128xf32, #tpu.memory_space<vmem>>, vector<8x128xf32>
    tpu.vector_store %arg9[%c0_61, %c0_62], %99 {strides = array<i32>} : memref<8x128xf32, #tpu.memory_space<vmem>>, vector<8x128xf32>,
    %c0_63 = arith.constant 0 : index
    %c0_64 = arith.constant 0 : index
    %103 = vector.load %arg8[%c0_63, %c0_64] : memref<8x128xf32, #tpu.memory_space<vmem>>, vector<8x128xf32>
    tpu.vector_store %arg8[%c0_63, %c0_64], %101 {strides = array<i32>} : memref<8x128xf32, #tpu.memory_space<vmem>>, vector<8x128xf32>,
    %c0_65 = arith.constant 0 : index
    %c0_66 = arith.constant 0 : index
    %104 = vector.load %arg8[%c0_65, %c0_66] : memref<8x128xf32, #tpu.memory_space<vmem>>, vector<8x128xf32>
    %105 = arith.truncf %104 : vector<8x128xf32> to vector<8x128xbf16>
    %c2_67 = arith.constant 2 : index
    %c0_68 = arith.constant 0 : index
    %c0_69 = arith.constant 0 : index
    %106 = vector.load %arg6[%c2_67, %c0_68, %c0_69] : memref<4x8x128xbf16, #tpu.memory_space<vmem>>, vector<1x8x128xbf16>
    %107 = vector.shape_cast %106 : vector<1x8x128xbf16> to vector<8x128xbf16>
    %108 = vector.shape_cast %105 : vector<8x128xbf16> to vector<1x8x128xbf16>
    tpu.vector_store %arg6[%c2_67, %c0_68, %c0_69], %108 {strides = array<i32>} : memref<4x8x128xbf16, #tpu.memory_space<vmem>>, vector<1x8x128xbf16>,
    %c3 = arith.constant 3 : index
    %c0_70 = arith.constant 0 : index
    %c0_71 = arith.constant 0 : index
    %109 = vector.load %arg7[%c3, %c0_70, %c0_71] : memref<4x8x512xf32, #tpu.memory_space<vmem>>, vector<1x8x512xf32>
    %110 = vector.shape_cast %109 : vector<1x8x512xf32> to vector<8x512xf32>
    %c0_72 = arith.constant 0 : index
    %c0_73 = arith.constant 0 : index
    %111 = vector.load %arg8[%c0_72, %c0_73] : memref<8x128xf32, #tpu.memory_space<vmem>>, vector<8x128xf32>
    %112 = arith.truncf %111 : vector<8x128xf32> to vector<8x128xbf16>
    %cst_74 = arith.constant dense<0.000000e+00> : vector<8x512xf32>
    %113 = tpu.matmul %112, %4, %cst_74 {dimension_numbers = #tpu.dot_dimension_numbers<[1], [0], [0], [1], [0, 0, 1, 1], [], []>} : vector<8x128xbf16>, vector<128x512xbf16>, vector<8x512xf32> -> vector<8x512xf32>
    %114 = arith.addf %110, %113 : vector<8x512xf32>
    %115 = vector.extract_strided_slice %114 {offsets = [0, 0], sizes = [8, 384], strides = [1, 1]} : vector<8x512xf32> to vector<8x384xf32>
    %cst_75 = arith.constant 5.000000e-01 : f32
    %116 = vector.broadcast %cst_75 : f32 to vector<8x384xf32>
    %117 = arith.mulf %116, %115 : vector<8x384xf32>
    %118 = math.tanh %117 : vector<8x384xf32>
    %cst_76 = arith.constant 5.000000e-01 : f32
    %119 = vector.broadcast %cst_76 : f32 to vector<8x384xf32>
    %120 = arith.mulf %119, %118 : vector<8x384xf32>
    %cst_77 = arith.constant 5.000000e-01 : f32
    %121 = vector.broadcast %cst_77 : f32 to vector<8x384xf32>
    %122 = arith.addf %120, %121 : vector<8x384xf32>
    %123 = vector.extract_strided_slice %114 {offsets = [0, 384], sizes = [8, 128], strides = [1, 1]} : vector<8x512xf32> to vector<8x128xf32>
    %124 = math.tanh %123 : vector<8x128xf32>
    %125 = vector.extract_strided_slice %122 {offsets = [0, 0], sizes = [8, 128], strides = [1, 1]} : vector<8x384xf32> to vector<8x128xf32>
    %126 = vector.extract_strided_slice %122 {offsets = [0, 128], sizes = [8, 128], strides = [1, 1]} : vector<8x384xf32> to vector<8x128xf32>
    %127 = vector.extract_strided_slice %122 {offsets = [0, 256], sizes = [8, 128], strides = [1, 1]} : vector<8x384xf32> to vector<8x128xf32>
    %c0_78 = arith.constant 0 : index
    %c0_79 = arith.constant 0 : index
    %128 = vector.load %arg9[%c0_78, %c0_79] : memref<8x128xf32, #tpu.memory_space<vmem>>, vector<8x128xf32>
    %129 = arith.mulf %126, %128 : vector<8x128xf32>
    %130 = arith.mulf %125, %124 : vector<8x128xf32>
    %131 = arith.addf %129, %130 : vector<8x128xf32>
    %132 = math.tanh %131 : vector<8x128xf32>
    %133 = arith.mulf %127, %132 : vector<8x128xf32>
    %c0_80 = arith.constant 0 : index
    %c0_81 = arith.constant 0 : index
    %134 = vector.load %arg9[%c0_80, %c0_81] : memref<8x128xf32, #tpu.memory_space<vmem>>, vector<8x128xf32>
    tpu.vector_store %arg9[%c0_80, %c0_81], %131 {strides = array<i32>} : memref<8x128xf32, #tpu.memory_space<vmem>>, vector<8x128xf32>,
    %c0_82 = arith.constant 0 : index
    %c0_83 = arith.constant 0 : index
    %135 = vector.load %arg8[%c0_82, %c0_83] : memref<8x128xf32, #tpu.memory_space<vmem>>, vector<8x128xf32>
    tpu.vector_store %arg8[%c0_82, %c0_83], %133 {strides = array<i32>} : memref<8x128xf32, #tpu.memory_space<vmem>>, vector<8x128xf32>,
    %c0_84 = arith.constant 0 : index
    %c0_85 = arith.constant 0 : index
    %136 = vector.load %arg8[%c0_84, %c0_85] : memref<8x128xf32, #tpu.memory_space<vmem>>, vector<8x128xf32>
    %137 = arith.truncf %136 : vector<8x128xf32> to vector<8x128xbf16>
    %c3_86 = arith.constant 3 : index
    %c0_87 = arith.constant 0 : index
    %c0_88 = arith.constant 0 : index
    %138 = vector.load %arg6[%c3_86, %c0_87, %c0_88] : memref<4x8x128xbf16, #tpu.memory_space<vmem>>, vector<1x8x128xbf16>
    %139 = vector.shape_cast %138 : vector<1x8x128xbf16> to vector<8x128xbf16>
    %140 = vector.shape_cast %137 : vector<8x128xbf16> to vector<1x8x128xbf16>
    tpu.vector_store %arg6[%c3_86, %c0_87, %c0_88], %140 {strides = array<i32>} : memref<4x8x128xbf16, #tpu.memory_space<vmem>>, vector<1x8x128xbf16>,
    return
  }
  func.func @transform_0(%arg0: i32, %arg1: i32) -> (i32, i32, i32) {
    %c0_i32 = arith.constant 0 : i32
    %c0_i32_0 = arith.constant 0 : i32
    return %arg1, %arg0, %c0_i32 : i32, i32, i32
  }
  func.func @transform_1(%arg0: i32, %arg1: i32) -> (i32, i32) {
    %c0_i32 = arith.constant 0 : i32
    %c0_i32_0 = arith.constant 0 : i32
    %c0_i32_1 = arith.constant 0 : i32
    return %c0_i32, %c0_i32_0 : i32, i32
  }
  func.func @transform_2(%arg0: i32, %arg1: i32) -> (i32, i32) {
    %c0_i32 = arith.constant 0 : i32
    %c0_i32_0 = arith.constant 0 : i32
    %c0_i32_1 = arith.constant 0 : i32
    return %c0_i32, %c0_i32_0 : i32, i32
  }
  func.func @transform_3(%arg0: i32, %arg1: i32) -> (i32, i32) {
    %c0_i32 = arith.constant 0 : i32
    %c0_i32_0 = arith.constant 0 : i32
    %c0_i32_1 = arith.constant 0 : i32
    return %c0_i32, %c0_i32_0 : i32, i32
  }
  func.func @transform_4(%arg0: i32, %arg1: i32) -> (i32, i32, i32) {
    %c1_i32 = arith.constant 1 : i32
    %0 = arith.subi %arg1, %c1_i32 : i32
    %c0_i32 = arith.constant 0 : i32
    %1 = arith.maxsi %0, %c0_i32 : i32
    %c0_i32_0 = arith.constant 0 : i32
    %c0_i32_1 = arith.constant 0 : i32
    return %1, %arg0, %c0_i32_0 : i32, i32, i32
  }
}

</mosaic_0001>

<llo_original>
// kernel: _lambda_.3
$region0: #{_lambda_.3}
  #allocation0 [shape = 'u32[]', space=smem, size = 0x4, offset = 0x4, fixed_abs, tag = 'smem constant byte address 0x4 - core index']
  #allocation1 [shape = 'u32[72,128]{1,0:T(1,128)}', space=vmem, size = 0x9000, scoped, tag = 'internal scratch']
  #allocation2 [shape = 'f32[4,8,512]{2,1,0:T(8,128)}', space=vmem, size = 0x10000, scoped, tag = 'scratch operand']
  #allocation3 [shape = 'f32[8,128]{1,0:T(8,128)}', space=vmem, size = 0x1000, scoped, tag = 'scratch operand']
  #allocation4 [shape = 'f32[8,128]{1,0:T(8,128)}', space=vmem, size = 0x1000, scoped, tag = 'scratch operand']
  %s0 = inlined_call_operand.vmem [shape: bf16[8,8,128], index: 0, kind: input, shape index: {}]
  %s1 = inlined_call_operand.hbm [shape: bf16[128,512], index: 1, kind: input, shape index: {}]
  %s2 = inlined_call_operand.hbm [shape: bf16[128,512], index: 2, kind: input, shape index: {}]
  %s3 = inlined_call_operand.vmem [shape: f32[1,512], index: 3, kind: input, shape index: {}]
  %s4 = inlined_call_operand.vmem [shape: bf16[4,8,128], index: 4, kind: output, shape index: {}]
  %s5 = sld [smem:[#allocation0]]
  $region61: #{_lambda_.3} parent=0
    _
  %s7 = ssub.s32 1, %s5
  %s8 = scalar_select 0, %s7, %s5
  $region1: #{_lambda_.3} parent=0
    #allocation5 [shape = 'u8[131072]{0}', space=vmem, size = 0x20000, scoped, tag = 'input window, operand 1, single buffered']
    #allocation6 [shape = 's32[2]{0}', space=sflag, size = 0x8, scoped, tag = 'scoped memory for _lambda_.3']
    #allocation7 [shape = 'u8[131072]{0}', space=vmem, size = 0x20000, scoped, tag = 'input window, operand 2, single buffered']
    #allocation8 [shape = 's32[1]{0}', space=sflag, size = 0x4, scoped, tag = 'scoped memory for _lambda_.3']
    %9 = vsyncpa [#allocation6], 0
    %10 = vsyncpa [#allocation8], 0
    loop: start=0, step=1, limit=4
    $region2: #{_lambda_.3} parent=1 // loop_pre_header
      _
    $region3: #{_lambda_.3} parent=1 // loop_header
      %s12 = sphi 0, %s16
      %p13 = scmp.ge.s32.totalorder %s12, 4
      %s19 = sphi 0, %s31
      %s20 = sphi 0, %s27
      %s21 = sphi 0, %s19
      %s22 = sphi 0, %s20
      %s23 = sphi 0, %s21
      %s24 = sphi 0, %s22
      %s36 = sphi 0, %s38
      %s39 = sphi 0, %s36
      %s40 = sphi 0, %s39
      %s56 = sphi 0, %s40
      %s60 = sphi 0, %s60
      %s62 = sphi 0, %s60
      %s63 = sphi 0, %s62
      %s77 = sphi 0, %s63
      %s81 = sphi 0, %s81
      %s83 = sphi 0, %s81
      %s84 = sphi 0, %s83
      %s98 = sphi 0, %s84
      %s102 = sphi 0, %s102
      %s104 = sphi 0, %s102
      %s105 = sphi 0, %s104
      %s119 = sphi 0, %s105
      %s133 = sphi 0, %s135
      %s136 = sphi 0, %s133
      %s137 = sphi 0, %s136
      %s153 = sphi 0, %s137
    $region4: #{_lambda_.3} parent=1 // loop_header_branch
      %15 = sbr.rel (%p13) target = $region8
    $region5: #{_lambda_.3} parent=1 // loop_body
      %s17 = ssub.s32 %s12, 1
      %s18 = ssub.s32 %s12, 2
      %s25 = sadd.s32 1, %s20
      %p26 = scmp.ge.s32.totalorder %s25, 2
      %s27 = scalar_select %p26, 0, %s25
      %s28 = sadd.s32 1, %s19
      %s29 = scalar_select %p26, %s28, %s19
      %p30 = scmp.ge.s32.totalorder %s29, 1
      %s31 = scalar_select %p30, 0, %s29
      %s32 = ssub.s32 %s20, %s27
      %s33 = ssub.s32 %s19, %s31
      %s34 = sor.u32 %s32, %s33
      %p35 = scmp.eq.s32.totalorder %s34, 0
      %s37 = sadd.s32 %s36, 1
      %s38 = scalar_select %p35, %s36, %s37
      %p41 = pneg %p35
      %p42 = scmp.eq.s32.totalorder %s12, 1
      %p43 = por %p41, %p42
      %p44 = scmp.ne.s32.totalorder %s36, %s39
      %p45 = scmp.eq.s32.totalorder %s12, 0
      %p46 = por %p44, %p45
      %p47 = scmp.ne.s32.totalorder %s36, %s39
      %p48 = scmp.eq.s32.totalorder %s17, 1
      %p49 = por %p47, %p48
      %p50 = scmp.ne.s32.totalorder %s39, %s40
      %p51 = scmp.eq.s32.totalorder %s17, 0
      %p52 = por %p50, %p51
      %p53 = scmp.ne.s32.totalorder %s39, %s40
      %p54 = scmp.eq.s32.totalorder %s18, 1
      %p55 = por %p53, %p54
      %p57 = scmp.ne.s32.totalorder %s40, %s56
      %p58 = scmp.eq.s32.totalorder %s18, 0
      %p59 = por %p57, %p58
      %s61 = sadd.s32 %s60, 1
      %p64 = scmp.eq.s32.totalorder %s12, 1
      %p65 = scmp.ne.s32.totalorder %s60, %s62
      %p66 = scmp.eq.s32.totalorder %s12, 0
      %p67 = por %p65, %p66
      %p68 = scmp.ne.s32.totalorder %s60, %s62
      %p69 = scmp.eq.s32.totalorder %s17, 1
      %p70 = por %p68, %p69
      %p71 = scmp.ne.s32.totalorder %s62, %s63
      %p72 = scmp.eq.s32.totalorder %s17, 0
      %p73 = por %p71, %p72
      %p74 = scmp.ne.s32.totalorder %s62, %s63
      %p75 = scmp.eq.s32.totalorder %s18, 1
      %p76 = por %p74, %p75
      %p78 = scmp.ne.s32.totalorder %s63, %s77
      %p79 = scmp.eq.s32.totalorder %s18, 0
      %p80 = por %p78, %p79
      %s82 = sadd.s32 %s81, 1
      %p85 = scmp.eq.s32.totalorder %s12, 1
      %p86 = scmp.ne.s32.totalorder %s81, %s83
      %p87 = scmp.eq.s32.totalorder %s12, 0
      %p88 = por %p86, %p87
      %p89 = scmp.ne.s32.totalorder %s81, %s83
      %p90 = scmp.eq.s32.totalorder %s17, 1
      %p91 = por %p89, %p90
      %p92 = scmp.ne.s32.totalorder %s83, %s84
      %p93 = scmp.eq.s32.totalorder %s17, 0
      %p94 = por %p92, %p93
      %p95 = scmp.ne.s32.totalorder %s83, %s84
      %p96 = scmp.eq.s32.totalorder %s18, 1
      %p97 = por %p95, %p96
      %p99 = scmp.ne.s32.totalorder %s84, %s98
      %p100 = scmp.eq.s32.totalorder %s18, 0
      %p101 = por %p99, %p100
      %s103 = sadd.s32 %s102, 1
      %p106 = scmp.eq.s32.totalorder %s12, 1
      %p107 = scmp.ne.s32.totalorder %s102, %s104
      %p108 = scmp.eq.s32.totalorder %s12, 0
      %p109 = por %p107, %p108
      %p110 = scmp.ne.s32.totalorder %s102, %s104
      %p111 = scmp.eq.s32.totalorder %s17, 1
      %p112 = por %p110, %p111
      %p113 = scmp.ne.s32.totalorder %s104, %s105
      %p114 = scmp.eq.s32.totalorder %s17, 0
      %p115 = por %p113, %p114
      %p116 = scmp.ne.s32.totalorder %s104, %s105
      %p117 = scmp.eq.s32.totalorder %s18, 1
      %p118 = por %p116, %p117
      %p120 = scmp.ne.s32.totalorder %s105, %s119
      %p121 = scmp.eq.s32.totalorder %s18, 0
      %p122 = por %p120, %p121
      %s123 = ssub.s32 %s20, 1
      %p124 = scmp.gt.s32.totalorder %s123, 0
      %s125 = scalar_select %p124, %s123, 0
      %s126 = ssub.s32 %s27, 1
      %p127 = scmp.gt.s32.totalorder %s126, 0
      %s128 = scalar_select %p127, %s126, 0
      %s129 = ssub.s32 %s125, %s128
      %s130 = ssub.s32 %s19, %s31
      %s131 = sor.u32 %s129, %s130
      %p132 = scmp.eq.s32.totalorder %s131, 0
      %s134 = sadd.s32 %s133, 1
      %s135 = scalar_select %p132, %s133, %s134
      %p138 = pneg %p132
      %p139 = scmp.eq.s32.totalorder %s12, 1
      %p140 = por %p138, %p139
      %p141 = scmp.ne.s32.totalorder %s133, %s136
      %p142 = scmp.eq.s32.totalorder %s12, 0
      %p143 = por %p141, %p142
      %p144 = scmp.ne.s32.totalorder %s133, %s136
      %p145 = scmp.eq.s32.totalorder %s17, 1
      %p146 = por %p144, %p145
      %p147 = scmp.ne.s32.totalorder %s136, %s137
      %p148 = scmp.eq.s32.totalorder %s17, 0
      %p149 = por %p147, %p148
      %p150 = scmp.ne.s32.totalorder %s136, %s137
      %p151 = scmp.eq.s32.totalorder %s18, 1
      %p152 = por %p150, %p151
      %p154 = scmp.ne.s32.totalorder %s137, %s153
      %p155 = scmp.eq.s32.totalorder %s18, 0
      %p156 = por %p154, %p155
      %p157 = scmp.le.s32.totalorder 1, %s12
      %p158 = scmp.lt.s32.totalorder %s12, 3
      %p159 = pnand %p157, %p158
      %p160 = pneg %p159
      // Predicated region
      $region9: #{_lambda_.3} parent=5 // pred_check
        _
      $region10: #{_lambda_.3} parent=5 // pred_check_branch
        %162 = sbr.rel (%p159) target = $region12
      $region11: #{_lambda_.3} parent=5 // pred_region
        %s163 = ssub.s32 %s12, 1
        // Predicated region
        $region13: #{_lambda_.3} parent=11 // pred_check
          %p164 = pneg %p73
        $region14: #{_lambda_.3} parent=11 // pred_check_branch
          %166 = sbr.rel (%p164) target = $region16
        $region15: #{_lambda_.3} parent=11 // pred_region
          %168 = vsyncadd [#allocation6], 0
          %s169 = sshll.u32 %s1, 4
          %s170 = int_to_ptr.hbm [resolvable:$true] %s169
          %s171 = sshll.u32 [#allocation5], 4
          %s172 = int_to_ptr.vmem [resolvable:$true] %s171
          %177 = dma.hbm_to_vmem [thread:$0]  %s170, 4096, %s172, [#allocation6], 256, 256, 16
        $region16: #{_lambda_.3} parent=11 // pred_fallthru
          _
        // Predicated region
        $region17: #{_lambda_.3} parent=11 // pred_check
          %p178 = pneg %p94
        $region18: #{_lambda_.3} parent=11 // pred_check_branch
          %180 = sbr.rel (%p178) target = $region20
        $region19: #{_lambda_.3} parent=11 // pred_region
          %182 = vsyncadd [#allocation8], 0
          %s183 = sshll.u32 %s2, 4
          %s184 = int_to_ptr.hbm [resolvable:$true] %s183
          %s185 = sshll.u32 [#allocation7], 4
          %s186 = int_to_ptr.vmem [resolvable:$true] %s185
          %191 = dma.hbm_to_vmem [thread:$0]  %s184, 4096, %s186, [#allocation8], 256, 256, 16
        $region20: #{_lambda_.3} parent=11 // pred_fallthru
          _
        // Predicated region
        $region21: #{_lambda_.3} parent=11 // pred_check
          %p192 = pneg %p115
        $region22: #{_lambda_.3} parent=11 // pred_check_branch
          %194 = sbr.rel (%p192) target = $region24
        $region23: #{_lambda_.3} parent=11 // pred_region
          _
        $region24: #{_lambda_.3} parent=11 // pred_fallthru
          _
      $region12: #{_lambda_.3} parent=5 // pred_fallthru
        _
      %p195 = scmp.lt.s32.totalorder %s12, 2
      // Predicated region
      $region25: #{_lambda_.3} parent=5 // pred_check
        %p196 = pneg %p195
      $region26: #{_lambda_.3} parent=5 // pred_check_branch
        %198 = sbr.rel (%p196) target = $region28
      $region27: #{_lambda_.3} parent=5 // pred_region
        // Predicated region
        $region29: #{_lambda_.3} parent=27 // pred_check
          %p199 = pneg %p46
        $region30: #{_lambda_.3} parent=27 // pred_check_branch
          %201 = sbr.rel (%p199) target = $region32
        $region31: #{_lambda_.3} parent=27 // pred_region
          %s202 = smul.u32 4, %s20
          %p203 = scmp.lt.s32.totalorder %s202, 7
          %s204 = scalar_select %p203, %s202, 7
          %p205 = scmp.lt.s32.totalorder %s19, 0
          %s206 = scalar_select %p205, %s19, 0
          %s207 = sadd.s32 %s206, %s204
          %s208 = smul.addr %s207, 4
          %s209 = scalar_lea.vmem %s0, %s208
          %s210 = smul.u32 4, %s20
        $region32: #{_lambda_.3} parent=27 // pred_fallthru
          _
      $region28: #{_lambda_.3} parent=5 // pred_fallthru
        _
      %p211 = scmp.le.s32.totalorder 1, %s12
      %p212 = scmp.lt.s32.totalorder %s12, 3
      %p213 = pnand %p211, %p212
      %p214 = pneg %p213
      // Predicated region
      $region33: #{_lambda_.3} parent=5 // pred_check
        _
      $region34: #{_lambda_.3} parent=5 // pred_check_branch
        %216 = sbr.rel (%p213) target = $region36
      $region35: #{_lambda_.3} parent=5 // pred_region
        %s217 = ssub.s32 %s12, 1
        // Predicated region
        $region37: #{_lambda_.3} parent=35 // pred_check
          %p218 = pneg %p73
        $region38: #{_lambda_.3} parent=35 // pred_check_branch
          %220 = sbr.rel (%p218) target = $region40
        $region39: #{_lambda_.3} parent=35 // pred_region
          %222 = dma.done [#allocation6], 4096
        $region40: #{_lambda_.3} parent=35 // pred_fallthru
          _
        // Predicated region
        $region41: #{_lambda_.3} parent=35 // pred_check
          %p223 = pneg %p94
        $region42: #{_lambda_.3} parent=35 // pred_check_branch
          %225 = sbr.rel (%p223) target = $region44
        $region43: #{_lambda_.3} parent=35 // pred_region
          %227 = dma.done [#allocation8], 4096
        $region44: #{_lambda_.3} parent=35 // pred_fallthru
          _
        %s228 = smul.u32 4, %s22
        %p229 = scmp.lt.s32.totalorder %s228, 7
        %s230 = scalar_select %p229, %s228, 7
        %p231 = scmp.lt.s32.totalorder %s21, 0
        %s232 = scalar_select %p231, %s21, 0
        %s233 = sadd.s32 %s232, %s230
        %s234 = smul.addr %s233, 4
        %s235 = scalar_lea.vmem %s0, %s234
        %p236 = pneg %p52
        %p237 = pneg %p49
        %p238 = pneg %p73
        %p239 = pneg %p70
        %p240 = pneg %p94
        %p241 = pneg %p91
        %p242 = pneg %p115
        %p243 = pneg %p112
        %p244 = pneg %p149
        %p245 = pneg %p146
        %s246 = ssub.s32 %s22, 1
        %p247 = scmp.gt.s32.totalorder %s246, 0
        %s248 = scalar_select %p247, %s246, 0
        %s249 = smul.u32 4, %s248
        %p250 = scmp.lt.s32.totalorder %s249, 3
        %s251 = scalar_select %p250, %s249, 3
        %p252 = scmp.lt.s32.totalorder %s21, 0
        %s253 = scalar_select %p252, %s21, 0
        %s254 = sadd.s32 %s253, %s251
        %s255 = smul.addr %s254, 4
        %s256 = scalar_lea.vmem %s4, %s255
        %s257 = smul.u32 4, %s22
        %p258 = scmp.lt.s32.totalorder %s257, 7
        %s259 = scalar_select %p258, %s257, 7
        %p260 = scmp.lt.s32.totalorder %s21, 0
        %s261 = scalar_select %p260, %s21, 0
        %s262 = sadd.s32 %s261, %s259
        %s263 = smul.addr %s262, 4
        %s264 = scalar_lea.vmem %s0, %s263
        %s265 = smul.u32 4, %s22
        %s266 = ssub.s32 %s22, 1
        %p267 = scmp.gt.s32.totalorder %s266, 0
        %s268 = scalar_select %p267, %s266, 0
        %s269 = smul.u32 4, %s268
        %p270 = scmp.lt.s32.totalorder %s269, 3
        %s271 = scalar_select %p270, %s269, 3
        %p272 = scmp.lt.s32.totalorder %s21, 0
        %s273 = scalar_select %p272, %s21, 0
        %s274 = sadd.s32 %s273, %s271
        %s275 = smul.addr %s274, 4
        %s276 = scalar_lea.vmem %s4, %s275
        %s277 = ssub.s32 %s22, 1
        %p278 = scmp.gt.s32.totalorder %s277, 0
        %s279 = scalar_select %p278, %s277, 0
        %s280 = smul.u32 4, %s279
        %p281 = scmp.eq.s32.totalorder %s22, 0
        // Predicated region
        $region45: #{_lambda_.3} parent=35 // pred_check
          %p282 = pneg %p281
        $region46: #{_lambda_.3} parent=35 // pred_check_branch
          %284 = sbr.rel (%p282) target = $region48
        $region47: #{_lambda_.3} parent=35 // pred_region
          %285 = vst [vmem:[#allocation3] sm:$0xff] 0.0
          %286 = vst [vmem:[#allocation4] sm:$0xff] 0.0
        $region48: #{_lambda_.3} parent=35 // pred_fallthru
          _
        %v287 = vld [vmem:[#allocation5] sm:$0xff]
        %v288 = vld [vmem:[#allocation5 + $0x8] sm:$0xff]
        %v289 = vld [vmem:[#allocation5 + $0x10] sm:$0xff]
        %v290 = vld [vmem:[#allocation5 + $0x18] sm:$0xff]
        %v291 = vld [vmem:[#allocation5 + $0x20] sm:$0xff]
        %v292 = vld [vmem:[#allocation5 + $0x28] sm:$0xff]
        %v293 = vld [vmem:[#allocation5 + $0x30] sm:$0xff]
        %v294 = vld [vmem:[#allocation5 + $0x38] sm:$0xff]
        %v295 = vld [vmem:[#allocation5 + $0x40] sm:$0xff]
        %v296 = vld [vmem:[#allocation5 + $0x48] sm:$0xff]
        %v297 = vld [vmem:[#allocation5 + $0x50] sm:$0xff]
        %v298 = vld [vmem:[#allocation5 + $0x58] sm:$0xff]
        %v299 = vld [vmem:[#allocation5 + $0x60] sm:$0xff]
        %v300 = vld [vmem:[#allocation5 + $0x68] sm:$0xff]
        %v301 = vld [vmem:[#allocation5 + $0x70] sm:$0xff]
        %v302 = vld [vmem:[#allocation5 + $0x78] sm:$0xff]
        %v303 = vld [vmem:[#allocation5 + $0x80] sm:$0xff]
        %v304 = vld [vmem:[#allocation5 + $0x88] sm:$0xff]
        %v305 = vld [vmem:[#allocation5 + $0x90] sm:$0xff]
        %v306 = vld [vmem:[#allocation5 + $0x98] sm:$0xff]
        %v307 = vld [vmem:[#allocation5 + $0xa0] sm:$0xff]
        %v308 = vld [vmem:[#allocation5 + $0xa8] sm:$0xff]
        %v309 = vld [vmem:[#allocation5 + $0xb0] sm:$0xff]
        %v310 = vld [vmem:[#allocation5 + $0xb8] sm:$0xff]
        %v311 = vld [vmem:[#allocation5 + $0xc0] sm:$0xff]
        %v312 = vld [vmem:[#allocation5 + $0xc8] sm:$0xff]
        %v313 = vld [vmem:[#allocation5 + $0xd0] sm:$0xff]
        %v314 = vld [vmem:[#allocation5 + $0xd8] sm:$0xff]
        %v315 = vld [vmem:[#allocation5 + $0xe0] sm:$0xff]
        %v316 = vld [vmem:[#allocation5 + $0xe8] sm:$0xff]
        %v317 = vld [vmem:[#allocation5 + $0xf0] sm:$0xff]
        %v318 = vld [vmem:[#allocation5 + $0xf8] sm:$0xff]
        %v319 = vld [vmem:[#allocation7] sm:$0xff]
        %v320 = vld [vmem:[#allocation7 + $0x8] sm:$0xff]
        %v321 = vld [vmem:[#allocation7 + $0x10] sm:$0xff]
        %v322 = vld [vmem:[#allocation7 + $0x18] sm:$0xff]
        %v323 = vld [vmem:[#allocation7 + $0x20] sm:$0xff]
        %v324 = vld [vmem:[#allocation7 + $0x28] sm:$0xff]
        %v325 = vld [vmem:[#allocation7 + $0x30] sm:$0xff]
        %v326 = vld [vmem:[#allocation7 + $0x38] sm:$0xff]
        %v327 = vld [vmem:[#allocation7 + $0x40] sm:$0xff]
        %v328 = vld [vmem:[#allocation7 + $0x48] sm:$0xff]
        %v329 = vld [vmem:[#allocation7 + $0x50] sm:$0xff]
        %v330 = vld [vmem:[#allocation7 + $0x58] sm:$0xff]
        %v331 = vld [vmem:[#allocation7 + $0x60] sm:$0xff]
        %v332 = vld [vmem:[#allocation7 + $0x68] sm:$0xff]
        %v333 = vld [vmem:[#allocation7 + $0x70] sm:$0xff]
        %v334 = vld [vmem:[#allocation7 + $0x78] sm:$0xff]
        %v335 = vld [vmem:[#allocation7 + $0x80] sm:$0xff]
        %v336 = vld [vmem:[#allocation7 + $0x88] sm:$0xff]
        %v337 = vld [vmem:[#allocation7 + $0x90] sm:$0xff]
        %v338 = vld [vmem:[#allocation7 + $0x98] sm:$0xff]
        %v339 = vld [vmem:[#allocation7 + $0xa0] sm:$0xff]
        %v340 = vld [vmem:[#allocation7 + $0xa8] sm:$0xff]
        %v341 = vld [vmem:[#allocation7 + $0xb0] sm:$0xff]
        %v342 = vld [vmem:[#allocation7 + $0xb8] sm:$0xff]
        %v343 = vld [vmem:[#allocation7 + $0xc0] sm:$0xff]
        %v344 = vld [vmem:[#allocation7 + $0xc8] sm:$0xff]
        %v345 = vld [vmem:[#allocation7 + $0xd0] sm:$0xff]
        %v346 = vld [vmem:[#allocation7 + $0xd8] sm:$0xff]
        %v347 = vld [vmem:[#allocation7 + $0xe0] sm:$0xff]
        %v348 = vld [vmem:[#allocation7 + $0xe8] sm:$0xff]
        %v349 = vld [vmem:[#allocation7 + $0xf0] sm:$0xff]
        %v350 = vld [vmem:[#allocation7 + $0xf8] sm:$0xff]
        %v351 = vld [vmem:[%s3] sm:$0xf]
        %v352 = vld [vmem:[%s264] sm:$0xf]
        %v353 = vld [vmem:[%s264 + $0x4] sm:$0xf]
        %v354 = vld [vmem:[%s264 + $0x8] sm:$0xf]
        %v355 = vld [vmem:[%s264 + $0xc] sm:$0xf]
        %v357 = vperm.slane %v351, 0
        %v358 = vperm.slane %v351, 1
        %v359 = vperm.slane %v351, 2
        %v360 = vperm.slane %v351, 3
        %v369 = vunpack.c.l.b16 %v352
        %v370 = vunpack.c.l.b16 %v353
        %v371 = vunpack.c.l.b16 %v354
        %v372 = vunpack.c.l.b16 %v355
        %v373 = vpack.c.b16 %v370, %v369
        %v374 = vpack.c.b16 %v372, %v371
        %v409 = vunpack.c.l.b16 %v287
        %v410 = vunpack.c.h.b16 %v287
        %v411 = vunpack.c.l.b16 %v288
        %v412 = vunpack.c.h.b16 %v288
        %v413 = vunpack.c.l.b16 %v289
        %v414 = vunpack.c.h.b16 %v289
        %v415 = vunpack.c.l.b16 %v290
        %v416 = vunpack.c.h.b16 %v290
        %v417 = vunpack.c.l.b16 %v291
        %v418 = vunpack.c.h.b16 %v291
        %v419 = vunpack.c.l.b16 %v292
        %v420 = vunpack.c.h.b16 %v292
        %v421 = vunpack.c.l.b16 %v293
        %v422 = vunpack.c.h.b16 %v293
        %v423 = vunpack.c.l.b16 %v294
        %v424 = vunpack.c.h.b16 %v294
        %v425 = vunpack.c.l.b16 %v295
        %v426 = vunpack.c.h.b16 %v295
        %v427 = vunpack.c.l.b16 %v296
        %v428 = vunpack.c.h.b16 %v296
        %v429 = vunpack.c.l.b16 %v297
        %v430 = vunpack.c.h.b16 %v297
        %v431 = vunpack.c.l.b16 %v298
        %v432 = vunpack.c.h.b16 %v298
        %v433 = vunpack.c.l.b16 %v299
        %v434 = vunpack.c.h.b16 %v299
        %v435 = vunpack.c.l.b16 %v300
        %v436 = vunpack.c.h.b16 %v300
        %v437 = vunpack.c.l.b16 %v301
        %v438 = vunpack.c.h.b16 %v301
        %v439 = vunpack.c.l.b16 %v302
        %v440 = vunpack.c.h.b16 %v302
        %v441 = vunpack.c.l.b16 %v303
        %v442 = vunpack.c.h.b16 %v303
        %v443 = vunpack.c.l.b16 %v304
        %v444 = vunpack.c.h.b16 %v304
        %v445 = vunpack.c.l.b16 %v305
        %v446 = vunpack.c.h.b16 %v305
        %v447 = vunpack.c.l.b16 %v306
        %v448 = vunpack.c.h.b16 %v306
        %v449 = vunpack.c.l.b16 %v307
        %v450 = vunpack.c.h.b16 %v307
        %v451 = vunpack.c.l.b16 %v308
        %v452 = vunpack.c.h.b16 %v308
        %v453 = vunpack.c.l.b16 %v309
        %v454 = vunpack.c.h.b16 %v309
        %v455 = vunpack.c.l.b16 %v310
        %v456 = vunpack.c.h.b16 %v310
        %v457 = vunpack.c.l.b16 %v311
        %v458 = vunpack.c.h.b16 %v311
        %v459 = vunpack.c.l.b16 %v312
        %v460 = vunpack.c.h.b16 %v312
        %v461 = vunpack.c.l.b16 %v313
        %v462 = vunpack.c.h.b16 %v313
        %v463 = vunpack.c.l.b16 %v314
        %v464 = vunpack.c.h.b16 %v314
        %v465 = vunpack.c.l.b16 %v315
        %v466 = vunpack.c.h.b16 %v315
        %v467 = vunpack.c.l.b16 %v316
        %v468 = vunpack.c.h.b16 %v316
        %v469 = vunpack.c.l.b16 %v317
        %v470 = vunpack.c.h.b16 %v317
        %v471 = vunpack.c.l.b16 %v318
        %v472 = vunpack.c.h.b16 %v318
        %v473 = vpack.c.b16 %v413, %v409
        %v474 = vpack.c.b16 %v414, %v410
        %v475 = vpack.c.b16 %v415, %v411
        %v476 = vpack.c.b16 %v416, %v412
        %v477 = vpack.c.b16 %v421, %v417
        %v478 = vpack.c.b16 %v422, %v418
        %v479 = vpack.c.b16 %v423, %v419
        %v480 = vpack.c.b16 %v424, %v420
        %v481 = vpack.c.b16 %v429, %v425
        %v482 = vpack.c.b16 %v430, %v426
        %v483 = vpack.c.b16 %v431, %v427
        %v484 = vpack.c.b16 %v432, %v428
        %v485 = vpack.c.b16 %v437, %v433
        %v486 = vpack.c.b16 %v438, %v434
        %v487 = vpack.c.b16 %v439, %v435
        %v488 = vpack.c.b16 %v440, %v436
        %v489 = vpack.c.b16 %v445, %v441
        %v490 = vpack.c.b16 %v446, %v442
        %v491 = vpack.c.b16 %v447, %v443
        %v492 = vpack.c.b16 %v448, %v444
        %v493 = vpack.c.b16 %v453, %v449
        %v494 = vpack.c.b16 %v454, %v450
        %v495 = vpack.c.b16 %v455, %v451
        %v496 = vpack.c.b16 %v456, %v452
        %v497 = vpack.c.b16 %v461, %v457
        %v498 = vpack.c.b16 %v462, %v458
        %v499 = vpack.c.b16 %v463, %v459
        %v500 = vpack.c.b16 %v464, %v460
        %v501 = vpack.c.b16 %v469, %v465
        %v502 = vpack.c.b16 %v470, %v466
        %v503 = vpack.c.b16 %v471, %v467
        %v504 = vpack.c.b16 %v472, %v468
        %537 = vmatpush.bf16.msra.mxu0 %v501
        %538 = vmatpush.bf16.msra.mxu0 %v497
        %539 = vmatpush.bf16.msra.mxu0 %v493
        %540 = vmatpush.bf16.msra.mxu0 %v489
        %541 = vmatpush.bf16.msra.mxu0 %v485
        %542 = vmatpush.bf16.msra.mxu0 %v481
        %543 = vmatpush.bf16.msra.mxu0 %v477
        %544 = vmatpush.bf16.msra.mxu0 %v473
        %545 = vmatmul.bf16.gmra.mxu0 %v373
        %v546 = vpop.f32.mrf.mxu0
        %v547 = vadd.f32 %v357, %v546
        %v548 = vpop.f32.mrf.mxu0
        %v549 = vadd.f32 %v357, %v548
        %550 = vmatmul.bf16.gmra.mxu0 %v374
        %v551 = vpop.f32.mrf.mxu0
        %v552 = vadd.f32 %v357, %v551
        %v553 = vpop.f32.mrf.mxu0
        %v554 = vadd.f32 %v357, %v553
        %555 = vdwg.mxu0
        %556 = vmatpush.bf16.msra.mxu0 %v502
        %557 = vmatpush.bf16.msra.mxu0 %v498
        %558 = vmatpush.bf16.msra.mxu0 %v494
        %559 = vmatpush.bf16.msra.mxu0 %v490
        %560 = vmatpush.bf16.msra.mxu0 %v486
        %561 = vmatpush.bf16.msra.mxu0 %v482
        %562 = vmatpush.bf16.msra.mxu0 %v478
        %563 = vmatpush.bf16.msra.mxu0 %v474
        %564 = vmatmul.bf16.gmra.mxu0 %v373
        %v565 = vpop.f32.mrf.mxu0
        %v566 = vadd.f32 %v358, %v565
        %v567 = vpop.f32.mrf.mxu0
        %v568 = vadd.f32 %v358, %v567
        %569 = vmatmul.bf16.gmra.mxu0 %v374
        %v570 = vpop.f32.mrf.mxu0
        %v571 = vadd.f32 %v358, %v570
        %v572 = vpop.f32.mrf.mxu0
        %v573 = vadd.f32 %v358, %v572
        %574 = vdwg.mxu0
        %575 = vmatpush.bf16.msra.mxu0 %v503
        %576 = vmatpush.bf16.msra.mxu0 %v499
        %577 = vmatpush.bf16.msra.mxu0 %v495
        %578 = vmatpush.bf16.msra.mxu0 %v491
        %579 = vmatpush.bf16.msra.mxu0 %v487
        %580 = vmatpush.bf16.msra.mxu0 %v483
        %581 = vmatpush.bf16.msra.mxu0 %v479
        %582 = vmatpush.bf16.msra.mxu0 %v475
        %583 = vmatmul.bf16.gmra.mxu0 %v373
        %v584 = vpop.f32.mrf.mxu0
        %v585 = vadd.f32 %v359, %v584
        %v586 = vpop.f32.mrf.mxu0
        %v587 = vadd.f32 %v359, %v586
        %588 = vmatmul.bf16.gmra.mxu0 %v374
        %v589 = vpop.f32.mrf.mxu0
        %v590 = vadd.f32 %v359, %v589
        %v591 = vpop.f32.mrf.mxu0
        %v592 = vadd.f32 %v359, %v591
        %593 = vdwg.mxu0
        %594 = vmatpush.bf16.msra.mxu0 %v504
        %595 = vmatpush.bf16.msra.mxu0 %v500
        %596 = vmatpush.bf16.msra.mxu0 %v496
        %597 = vmatpush.bf16.msra.mxu0 %v492
        %598 = vmatpush.bf16.msra.mxu0 %v488
        %599 = vmatpush.bf16.msra.mxu0 %v484
        %600 = vmatpush.bf16.msra.mxu0 %v480
        %601 = vmatpush.bf16.msra.mxu0 %v476
        %602 = vmatmul.bf16.gmra.mxu0 %v373
        %v603 = vpop.f32.mrf.mxu0
        %v604 = vadd.f32 %v360, %v603
        %v605 = vpop.f32.mrf.mxu0
        %v606 = vadd.f32 %v360, %v605
        %607 = vmatmul.bf16.gmra.mxu0 %v374
        %v608 = vpop.f32.mrf.mxu0
        %v609 = vadd.f32 %v360, %v608
        %v610 = vpop.f32.mrf.mxu0
        %v611 = vadd.f32 %v360, %v610
        %612 = vdwg.mxu0
        %613 = vst [vmem:[#allocation2] sm:$0xff] %v547
        %614 = vst [vmem:[#allocation2 + $0x8] sm:$0xff] %v566
        %615 = vst [vmem:[#allocation2 + $0x10] sm:$0xff] %v585
        %616 = vst [vmem:[#allocation2 + $0x18] sm:$0xff] %v604
        %617 = vst [vmem:[#allocation2 + $0x20] sm:$0xff] %v549
        %618 = vst [vmem:[#allocation2 + $0x28] sm:$0xff] %v568
        %619 = vst [vmem:[#allocation2 + $0x30] sm:$0xff] %v587
        %620 = vst [vmem:[#allocation2 + $0x38] sm:$0xff] %v606
        %621 = vst [vmem:[#allocation2 + $0x40] sm:$0xff] %v552
        %622 = vst [vmem:[#allocation2 + $0x48] sm:$0xff] %v571
        %623 = vst [vmem:[#allocation2 + $0x50] sm:$0xff] %v590
        %624 = vst [vmem:[#allocation2 + $0x58] sm:$0xff] %v609
        %625 = vst [vmem:[#allocation2 + $0x60] sm:$0xff] %v554
        %626 = vst [vmem:[#allocation2 + $0x68] sm:$0xff] %v573
        %627 = vst [vmem:[#allocation2 + $0x70] sm:$0xff] %v592
        %628 = vst [vmem:[#allocation2 + $0x78] sm:$0xff] %v611
        %v629 = vld [vmem:[#allocation2] sm:$0xff]
        %v630 = vld [vmem:[#allocation2 + $0x8] sm:$0xff]
        %v631 = vld [vmem:[#allocation2 + $0x10] sm:$0xff]
        %v632 = vld [vmem:[#allocation2 + $0x18] sm:$0xff]
        %v633 = vld [vmem:[#allocation3] sm:$0xff]
        %v634 = vpack.c.bf16 %v633, %v633
        %v667 = vunpack.c.l.b16 %v319
        %v668 = vunpack.c.h.b16 %v319
        %v669 = vunpack.c.l.b16 %v320
        %v670 = vunpack.c.h.b16 %v320
        %v671 = vunpack.c.l.b16 %v321
        %v672 = vunpack.c.h.b16 %v321
        %v673 = vunpack.c.l.b16 %v322
        %v674 = vunpack.c.h.b16 %v322
        %v675 = vunpack.c.l.b16 %v323
        %v676 = vunpack.c.h.b16 %v323
        %v677 = vunpack.c.l.b16 %v324
        %v678 = vunpack.c.h.b16 %v324
        %v679 = vunpack.c.l.b16 %v325
        %v680 = vunpack.c.h.b16 %v325
        %v681 = vunpack.c.l.b16 %v326
        %v682 = vunpack.c.h.b16 %v326
        %v683 = vunpack.c.l.b16 %v327
        %v684 = vunpack.c.h.b16 %v327
        %v685 = vunpack.c.l.b16 %v328
        %v686 = vunpack.c.h.b16 %v328
        %v687 = vunpack.c.l.b16 %v329
        %v688 = vunpack.c.h.b16 %v329
        %v689 = vunpack.c.l.b16 %v330
        %v690 = vunpack.c.h.b16 %v330
        %v691 = vunpack.c.l.b16 %v331
        %v692 = vunpack.c.h.b16 %v331
        %v693 = vunpack.c.l.b16 %v332
        %v694 = vunpack.c.h.b16 %v332
        %v695 = vunpack.c.l.b16 %v333
        %v696 = vunpack.c.h.b16 %v333
        %v697 = vunpack.c.l.b16 %v334
        %v698 = vunpack.c.h.b16 %v334
        %v699 = vunpack.c.l.b16 %v335
        %v700 = vunpack.c.h.b16 %v335
        %v701 = vunpack.c.l.b16 %v336
        %v702 = vunpack.c.h.b16 %v336
        %v703 = vunpack.c.l.b16 %v337
        %v704 = vunpack.c.h.b16 %v337
        %v705 = vunpack.c.l.b16 %v338
        %v706 = vunpack.c.h.b16 %v338
        %v707 = vunpack.c.l.b16 %v339
        %v708 = vunpack.c.h.b16 %v339
        %v709 = vunpack.c.l.b16 %v340
        %v710 = vunpack.c.h.b16 %v340
        %v711 = vunpack.c.l.b16 %v341
        %v712 = vunpack.c.h.b16 %v341
        %v713 = vunpack.c.l.b16 %v342
        %v714 = vunpack.c.h.b16 %v342
        %v715 = vunpack.c.l.b16 %v343
        %v716 = vunpack.c.h.b16 %v343
        %v717 = vunpack.c.l.b16 %v344
        %v718 = vunpack.c.h.b16 %v344
        %v719 = vunpack.c.l.b16 %v345
        %v720 = vunpack.c.h.b16 %v345
        %v721 = vunpack.c.l.b16 %v346
        %v722 = vunpack.c.h.b16 %v346
        %v723 = vunpack.c.l.b16 %v347
        %v724 = vunpack.c.h.b16 %v347
        %v725 = vunpack.c.l.b16 %v348
        %v726 = vunpack.c.h.b16 %v348
        %v727 = vunpack.c.l.b16 %v349
        %v728 = vunpack.c.h.b16 %v349
        %v729 = vunpack.c.l.b16 %v350
        %v730 = vunpack.c.h.b16 %v350
        %v731 = vpack.c.b16 %v671, %v667
        %v732 = vpack.c.b16 %v672, %v668
        %v733 = vpack.c.b16 %v673, %v669
        %v734 = vpack.c.b16 %v674, %v670
        %v735 = vpack.c.b16 %v679, %v675
        %v736 = vpack.c.b16 %v680, %v676
        %v737 = vpack.c.b16 %v681, %v677
        %v738 = vpack.c.b16 %v682, %v678
        %v739 = vpack.c.b16 %v687, %v683
        %v740 = vpack.c.b16 %v688, %v684
        %v741 = vpack.c.b16 %v689, %v685
        %v742 = vpack.c.b16 %v690, %v686
        %v743 = vpack.c.b16 %v695, %v691
        %v744 = vpack.c.b16 %v696, %v692
        %v745 = vpack.c.b16 %v697, %v693
        %v746 = vpack.c.b16 %v698, %v694
        %v747 = vpack.c.b16 %v703, %v699
        %v748 = vpack.c.b16 %v704, %v700
        %v749 = vpack.c.b16 %v705, %v701
        %v750 = vpack.c.b16 %v706, %v702
        %v751 = vpack.c.b16 %v711, %v707
        %v752 = vpack.c.b16 %v712, %v708
        %v753 = vpack.c.b16 %v713, %v709
        %v754 = vpack.c.b16 %v714, %v710
        %v755 = vpack.c.b16 %v719, %v715
        %v756 = vpack.c.b16 %v720, %v716
        %v757 = vpack.c.b16 %v721, %v717
        %v758 = vpack.c.b16 %v722, %v718
        %v759 = vpack.c.b16 %v727, %v723
        %v760 = vpack.c.b16 %v728, %v724
        %v761 = vpack.c.b16 %v729, %v725
        %v762 = vpack.c.b16 %v730, %v726
        %795 = vmatpush.bf16.msra.mxu0 %v759
        %796 = vmatpush.bf16.msra.mxu0 %v755
        %797 = vmatpush.bf16.msra.mxu0 %v751
        %798 = vmatpush.bf16.msra.mxu0 %v747
        %799 = vmatpush.bf16.msra.mxu0 %v743
        %800 = vmatpush.bf16.msra.mxu0 %v739
        %801 = vmatpush.bf16.msra.mxu0 %v735
        %802 = vmatpush.bf16.msra.mxu0 %v731
        %803 = vmatmul.bf16.gmra.mxu0 %v634
        %v804 = vpop.f32.mrf.mxu0
        %v805 = vadd.f32 0.0, %v804
        %v806 = vpop.f32.mrf.mxu0
        %807 = vdwg.mxu0
        %808 = vmatpush.bf16.msra.mxu0 %v760
        %809 = vmatpush.bf16.msra.mxu0 %v756
        %810 = vmatpush.bf16.msra.mxu0 %v752
        %811 = vmatpush.bf16.msra.mxu0 %v748
        %812 = vmatpush.bf16.msra.mxu0 %v744
        %813 = vmatpush.bf16.msra.mxu0 %v740
        %814 = vmatpush.bf16.msra.mxu0 %v736
        %815 = vmatpush.bf16.msra.mxu0 %v732
        %816 = vmatmul.bf16.gmra.mxu0 %v634
        %v817 = vpop.f32.mrf.mxu0
        %v818 = vadd.f32 0.0, %v817
        %v819 = vpop.f32.mrf.mxu0
        %820 = vdwg.mxu0
        %821 = vmatpush.bf16.msra.mxu0 %v761
        %822 = vmatpush.bf16.msra.mxu0 %v757
        %823 = vmatpush.bf16.msra.mxu0 %v753
        %824 = vmatpush.bf16.msra.mxu0 %v749
        %825 = vmatpush.bf16.msra.mxu0 %v745
        %826 = vmatpush.bf16.msra.mxu0 %v741
        %827 = vmatpush.bf16.msra.mxu0 %v737
        %828 = vmatpush.bf16.msra.mxu0 %v733
        %829 = vmatmul.bf16.gmra.mxu0 %v634
        %v830 = vpop.f32.mrf.mxu0
        %v831 = vadd.f32 0.0, %v830
        %v832 = vpop.f32.mrf.mxu0
        %833 = vdwg.mxu0
        %834 = vmatpush.bf16.msra.mxu0 %v762
        %835 = vmatpush.bf16.msra.mxu0 %v758
        %836 = vmatpush.bf16.msra.mxu0 %v754
        %837 = vmatpush.bf16.msra.mxu0 %v750
        %838 = vmatpush.bf16.msra.mxu0 %v746
        %839 = vmatpush.bf16.msra.mxu0 %v742
        %840 = vmatpush.bf16.msra.mxu0 %v738
        %841 = vmatpush.bf16.msra.mxu0 %v734
        %842 = vmatmul.bf16.gmra.mxu0 %v634
        %v843 = vpop.f32.mrf.mxu0
        %v844 = vadd.f32 0.0, %v843
        %v845 = vpop.f32.mrf.mxu0
        %846 = vdwg.mxu0
        %v847 = vadd.f32 %v629, %v805
        %v848 = vadd.f32 %v630, %v818
        %v849 = vadd.f32 %v631, %v831
        %v850 = vadd.f32 %v632, %v844
        %v851 = vmul.f32 %v847, 0.5
        %v852 = vmul.f32 %v848, 0.5
        %v853 = vmul.f32 %v849, 0.5
        %v854 = vtanh.pop %v851
        %v855 = vtanh.pop %v852
        %v856 = vtanh.pop %v853
        %v857 = vmul.f32 %v854, 0.5
        %v858 = vmul.f32 %v855, 0.5
        %v859 = vmul.f32 %v856, 0.5
        %v860 = vadd.f32 %v857, 0.5
        %v861 = vadd.f32 %v858, 0.5
        %v862 = vadd.f32 %v859, 0.5
        %v863 = vtanh.pop %v850
        %v864 = vld [vmem:[#allocation4] sm:$0xff]
        %v865 = vmul.f32 %v861, %v864
        %v866 = vmul.f32 %v860, %v863
        %v867 = vadd.f32 %v865, %v866
        %v868 = vtanh.pop %v867
        %v869 = vmul.f32 %v862, %v868
        %870 = vst [vmem:[#allocation4] sm:$0xff] %v867
        %871 = vst [vmem:[#allocation3] sm:$0xff] %v869
        %v872 = vld [vmem:[#allocation3] sm:$0xff]
        %v873 = vpack.c.bf16 %v872, %v872
        %874 = vst [vmem:[%s276] sm:$0xf] %v873
        %s875 = scalar_lea.vmem [#allocation2], 32
        %v876 = vld [vmem:[%s875] sm:$0xff]
        %v877 = vld [vmem:[%s875 + $0x8] sm:$0xff]
        %v878 = vld [vmem:[%s875 + $0x10] sm:$0xff]
        %v879 = vld [vmem:[%s875 + $0x18] sm:$0xff]
        %v880 = vld [vmem:[#allocation3] sm:$0xff]
        %v881 = vpack.c.bf16 %v880, %v880
        %882 = vmatpush.bf16.msra.mxu0 %v759
        %883 = vmatpush.bf16.msra.mxu0 %v755
        %884 = vmatpush.bf16.msra.mxu0 %v751
        %885 = vmatpush.bf16.msra.mxu0 %v747
        %886 = vmatpush.bf16.msra.mxu0 %v743
        %887 = vmatpush.bf16.msra.mxu0 %v739
        %888 = vmatpush.bf16.msra.mxu0 %v735
        %889 = vmatpush.bf16.msra.mxu0 %v731
        %890 = vmatmul.bf16.gmra.mxu0 %v881
        %v891 = vpop.f32.mrf.mxu0
        %v892 = vadd.f32 0.0, %v891
        %v893 = vpop.f32.mrf.mxu0
        %894 = vdwg.mxu0
        %895 = vmatpush.bf16.msra.mxu0 %v760
        %896 = vmatpush.bf16.msra.mxu0 %v756
        %897 = vmatpush.bf16.msra.mxu0 %v752
        %898 = vmatpush.bf16.msra.mxu0 %v748
        %899 = vmatpush.bf16.msra.mxu0 %v744
        %900 = vmatpush.bf16.msra.mxu0 %v740
        %901 = vmatpush.bf16.msra.mxu0 %v736
        %902 = vmatpush.bf16.msra.mxu0 %v732
        %903 = vmatmul.bf16.gmra.mxu0 %v881
        %v904 = vpop.f32.mrf.mxu0
        %v905 = vadd.f32 0.0, %v904
        %v906 = vpop.f32.mrf.mxu0
        %907 = vdwg.mxu0
        %908 = vmatpush.bf16.msra.mxu0 %v761
        %909 = vmatpush.bf16.msra.mxu0 %v757
        %910 = vmatpush.bf16.msra.mxu0 %v753
        %911 = vmatpush.bf16.msra.mxu0 %v749
        %912 = vmatpush.bf16.msra.mxu0 %v745
        %913 = vmatpush.bf16.msra.mxu0 %v741
        %914 = vmatpush.bf16.msra.mxu0 %v737
        %915 = vmatpush.bf16.msra.mxu0 %v733
        %916 = vmatmul.bf16.gmra.mxu0 %v881
        %v917 = vpop.f32.mrf.mxu0
        %v918 = vadd.f32 0.0, %v917
        %v919 = vpop.f32.mrf.mxu0
        %920 = vdwg.mxu0
        %921 = vmatpush.bf16.msra.mxu0 %v762
        %922 = vmatpush.bf16.msra.mxu0 %v758
        %923 = vmatpush.bf16.msra.mxu0 %v754
        %924 = vmatpush.bf16.msra.mxu0 %v750
        %925 = vmatpush.bf16.msra.mxu0 %v746
        %926 = vmatpush.bf16.msra.mxu0 %v742
        %927 = vmatpush.bf16.msra.mxu0 %v738
        %928 = vmatpush.bf16.msra.mxu0 %v734
        %929 = vmatmul.bf16.gmra.mxu0 %v881
        %v930 = vpop.f32.mrf.mxu0
        %v931 = vadd.f32 0.0, %v930
        %v932 = vpop.f32.mrf.mxu0
        %933 = vdwg.mxu0
        %v934 = vadd.f32 %v876, %v892
        %v935 = vadd.f32 %v877, %v905
        %v936 = vadd.f32 %v878, %v918
        %v937 = vadd.f32 %v879, %v931
        %v938 = vmul.f32 %v934, 0.5
        %v939 = vmul.f32 %v935, 0.5
        %v940 = vmul.f32 %v936, 0.5
        %v941 = vtanh.pop %v938
        %v942 = vtanh.pop %v939
        %v943 = vtanh.pop %v940
        %v944 = vmul.f32 %v941, 0.5
        %v945 = vmul.f32 %v942, 0.5
        %v946 = vmul.f32 %v943, 0.5
        %v947 = vadd.f32 %v944, 0.5
        %v948 = vadd.f32 %v945, 0.5
        %v949 = vadd.f32 %v946, 0.5
        %v950 = vtanh.pop %v937
        %v951 = vld [vmem:[#allocation4] sm:$0xff]
        %v952 = vmul.f32 %v948, %v951
        %v953 = vmul.f32 %v947, %v950
        %v954 = vadd.f32 %v952, %v953
        %v955 = vtanh.pop %v954
        %v956 = vmul.f32 %v949, %v955
        %957 = vst [vmem:[#allocation4] sm:$0xff] %v954
        %958 = vst [vmem:[#allocation3] sm:$0xff] %v956
        %v959 = vld [vmem:[#allocation3] sm:$0xff]
        %v960 = vpack.c.bf16 %v959, %v959
        %s961 = scalar_lea.vmem %s276, 4
        %962 = vst [vmem:[%s961] sm:$0xf] %v960
        %s963 = scalar_lea.vmem [#allocation2], 64
        %v964 = vld [vmem:[%s963] sm:$0xff]
        %v965 = vld [vmem:[%s963 + $0x8] sm:$0xff]
        %v966 = vld [vmem:[%s963 + $0x10] sm:$0xff]
        %v967 = vld [vmem:[%s963 + $0x18] sm:$0xff]
        %v968 = vld [vmem:[#allocation3] sm:$0xff]
        %v969 = vpack.c.bf16 %v968, %v968
        %970 = vmatpush.bf16.msra.mxu0 %v759
        %971 = vmatpush.bf16.msra.mxu0 %v755
        %972 = vmatpush.bf16.msra.mxu0 %v751
        %973 = vmatpush.bf16.msra.mxu0 %v747
        %974 = vmatpush.bf16.msra.mxu0 %v743
        %975 = vmatpush.bf16.msra.mxu0 %v739
        %976 = vmatpush.bf16.msra.mxu0 %v735
        %977 = vmatpush.bf16.msra.mxu0 %v731
        %978 = vmatmul.bf16.gmra.mxu0 %v969
        %v979 = vpop.f32.mrf.mxu0
        %v980 = vadd.f32 0.0, %v979
        %v981 = vpop.f32.mrf.mxu0
        %982 = vdwg.mxu0
        %983 = vmatpush.bf16.msra.mxu0 %v760
        %984 = vmatpush.bf16.msra.mxu0 %v756
        %985 = vmatpush.bf16.msra.mxu0 %v752
        %986 = vmatpush.bf16.msra.mxu0 %v748
        %987 = vmatpush.bf16.msra.mxu0 %v744
        %988 = vmatpush.bf16.msra.mxu0 %v740
        %989 = vmatpush.bf16.msra.mxu0 %v736
        %990 = vmatpush.bf16.msra.mxu0 %v732
        %991 = vmatmul.bf16.gmra.mxu0 %v969
        %v992 = vpop.f32.mrf.mxu0
        %v993 = vadd.f32 0.0, %v992
        %v994 = vpop.f32.mrf.mxu0
        %995 = vdwg.mxu0
        %996 = vmatpush.bf16.msra.mxu0 %v761
        %997 = vmatpush.bf16.msra.mxu0 %v757
        %998 = vmatpush.bf16.msra.mxu0 %v753
        %999 = vmatpush.bf16.msra.mxu0 %v749
        %1000 = vmatpush.bf16.msra.mxu0 %v745
        %1001 = vmatpush.bf16.msra.mxu0 %v741
        %1002 = vmatpush.bf16.msra.mxu0 %v737
        %1003 = vmatpush.bf16.msra.mxu0 %v733
        %1004 = vmatmul.bf16.gmra.mxu0 %v969
        %v1005 = vpop.f32.mrf.mxu0
        %v1006 = vadd.f32 0.0, %v1005
        %v1007 = vpop.f32.mrf.mxu0
        %1008 = vdwg.mxu0
        %1009 = vmatpush.bf16.msra.mxu0 %v762
        %1010 = vmatpush.bf16.msra.mxu0 %v758
        %1011 = vmatpush.bf16.msra.mxu0 %v754
        %1012 = vmatpush.bf16.msra.mxu0 %v750
        %1013 = vmatpush.bf16.msra.mxu0 %v746
        %1014 = vmatpush.bf16.msra.mxu0 %v742
        %1015 = vmatpush.bf16.msra.mxu0 %v738
        %1016 = vmatpush.bf16.msra.mxu0 %v734
        %1017 = vmatmul.bf16.gmra.mxu0 %v969
        %v1018 = vpop.f32.mrf.mxu0
        %v1019 = vadd.f32 0.0, %v1018
        %v1020 = vpop.f32.mrf.mxu0
        %1021 = vdwg.mxu0
        %v1022 = vadd.f32 %v964, %v980
        %v1023 = vadd.f32 %v965, %v993
        %v1024 = vadd.f32 %v966, %v1006
        %v1025 = vadd.f32 %v967, %v1019
        %v1026 = vmul.f32 %v1022, 0.5
        %v1027 = vmul.f32 %v1023, 0.5
        %v1028 = vmul.f32 %v1024, 0.5
        %v1029 = vtanh.pop %v1026
        %v1030 = vtanh.pop %v1027
        %v1031 = vtanh.pop %v1028
        %v1032 = vmul.f32 %v1029, 0.5
        %v1033 = vmul.f32 %v1030, 0.5
        %v1034 = vmul.f32 %v1031, 0.5
        %v1035 = vadd.f32 %v1032, 0.5
        %v1036 = vadd.f32 %v1033, 0.5
        %v1037 = vadd.f32 %v1034, 0.5
        %v1038 = vtanh.pop %v1025
        %v1039 = vld [vmem:[#allocation4] sm:$0xff]
        %v1040 = vmul.f32 %v1036, %v1039
        %v1041 = vmul.f32 %v1035, %v1038
        %v1042 = vadd.f32 %v1040, %v1041
        %v1043 = vtanh.pop %v1042
        %v1044 = vmul.f32 %v1037, %v1043
        %1045 = vst [vmem:[#allocation4] sm:$0xff] %v1042
        %1046 = vst [vmem:[#allocation3] sm:$0xff] %v1044
        %v1047 = vld [vmem:[#allocation3] sm:$0xff]
        %v1048 = vpack.c.bf16 %v1047, %v1047
        %s1049 = scalar_lea.vmem %s276, 8
        %1050 = vst [vmem:[%s1049] sm:$0xf] %v1048
        %s1051 = scalar_lea.vmem [#allocation2], 96
        %v1052 = vld [vmem:[%s1051] sm:$0xff]
        %v1053 = vld [vmem:[%s1051 + $0x8] sm:$0xff]
        %v1054 = vld [vmem:[%s1051 + $0x10] sm:$0xff]
        %v1055 = vld [vmem:[%s1051 + $0x18] sm:$0xff]
        %v1056 = vld [vmem:[#allocation3] sm:$0xff]
        %v1057 = vpack.c.bf16 %v1056, %v1056
        %1058 = vmatpush.bf16.msra.mxu0 %v759
        %1059 = vmatpush.bf16.msra.mxu0 %v755
        %1060 = vmatpush.bf16.msra.mxu0 %v751
        %1061 = vmatpush.bf16.msra.mxu0 %v747
        %1062 = vmatpush.bf16.msra.mxu0 %v743
        %1063 = vmatpush.bf16.msra.mxu0 %v739
        %1064 = vmatpush.bf16.msra.mxu0 %v735
        %1065 = vmatpush.bf16.msra.mxu0 %v731
        %1066 = vmatmul.bf16.gmra.mxu0 %v1057
        %v1067 = vpop.f32.mrf.mxu0
        %v1068 = vadd.f32 0.0, %v1067
        %v1069 = vpop.f32.mrf.mxu0
        %1070 = vdwg.mxu0
        %1071 = vmatpush.bf16.msra.mxu0 %v760
        %1072 = vmatpush.bf16.msra.mxu0 %v756
        %1073 = vmatpush.bf16.msra.mxu0 %v752
        %1074 = vmatpush.bf16.msra.mxu0 %v748
        %1075 = vmatpush.bf16.msra.mxu0 %v744
        %1076 = vmatpush.bf16.msra.mxu0 %v740
        %1077 = vmatpush.bf16.msra.mxu0 %v736
        %1078 = vmatpush.bf16.msra.mxu0 %v732
        %1079 = vmatmul.bf16.gmra.mxu0 %v1057
        %v1080 = vpop.f32.mrf.mxu0
        %v1081 = vadd.f32 0.0, %v1080
        %v1082 = vpop.f32.mrf.mxu0
        %1083 = vdwg.mxu0
        %1084 = vmatpush.bf16.msra.mxu0 %v761
        %1085 = vmatpush.bf16.msra.mxu0 %v757
        %1086 = vmatpush.bf16.msra.mxu0 %v753
        %1087 = vmatpush.bf16.msra.mxu0 %v749
        %1088 = vmatpush.bf16.msra.mxu0 %v745
        %1089 = vmatpush.bf16.msra.mxu0 %v741
        %1090 = vmatpush.bf16.msra.mxu0 %v737
        %1091 = vmatpush.bf16.msra.mxu0 %v733
        %1092 = vmatmul.bf16.gmra.mxu0 %v1057
        %v1093 = vpop.f32.mrf.mxu0
        %v1094 = vadd.f32 0.0, %v1093
        %v1095 = vpop.f32.mrf.mxu0
        %1096 = vdwg.mxu0
        %1097 = vmatpush.bf16.msra.mxu0 %v762
        %1098 = vmatpush.bf16.msra.mxu0 %v758
        %1099 = vmatpush.bf16.msra.mxu0 %v754
        %1100 = vmatpush.bf16.msra.mxu0 %v750
        %1101 = vmatpush.bf16.msra.mxu0 %v746
        %1102 = vmatpush.bf16.msra.mxu0 %v742
        %1103 = vmatpush.bf16.msra.mxu0 %v738
        %1104 = vmatpush.bf16.msra.mxu0 %v734
        %1105 = vmatmul.bf16.gmra.mxu0 %v1057
        %v1106 = vpop.f32.mrf.mxu0
        %v1107 = vadd.f32 0.0, %v1106
        %v1108 = vpop.f32.mrf.mxu0
        %1109 = vdwg.mxu0
        %v1110 = vadd.f32 %v1052, %v1068
        %v1111 = vadd.f32 %v1053, %v1081
        %v1112 = vadd.f32 %v1054, %v1094
        %v1113 = vadd.f32 %v1055, %v1107
        %v1114 = vmul.f32 %v1110, 0.5
        %v1115 = vmul.f32 %v1111, 0.5
        %v1116 = vmul.f32 %v1112, 0.5
        %v1117 = vtanh.pop %v1114
        %v1118 = vtanh.pop %v1115
        %v1119 = vtanh.pop %v1116
        %v1120 = vmul.f32 %v1117, 0.5
        %v1121 = vmul.f32 %v1118, 0.5
        %v1122 = vmul.f32 %v1119, 0.5
        %v1123 = vadd.f32 %v1120, 0.5
        %v1124 = vadd.f32 %v1121, 0.5
        %v1125 = vadd.f32 %v1122, 0.5
        %v1126 = vtanh.pop %v1113
        %v1127 = vld [vmem:[#allocation4] sm:$0xff]
        %v1128 = vmul.f32 %v1124, %v1127
        %v1129 = vmul.f32 %v1123, %v1126
        %v1130 = vadd.f32 %v1128, %v1129
        %v1131 = vtanh.pop %v1130
        %v1132 = vmul.f32 %v1125, %v1131
        %1133 = vst [vmem:[#allocation4] sm:$0xff] %v1130
        %1134 = vst [vmem:[#allocation3] sm:$0xff] %v1132
        %v1135 = vld [vmem:[#allocation3] sm:$0xff]
        %v1136 = vpack.c.bf16 %v1135, %v1135
        %s1137 = scalar_lea.vmem %s276, 12
        %1138 = vst [vmem:[%s1137] sm:$0xf] %v1136
        %s1139 = ssub.s32 %s22, 1
        %p1140 = scmp.gt.s32.totalorder %s1139, 0
        %s1141 = scalar_select %p1140, %s1139, 0
        %s1142 = smul.u32 4, %s1141
        %p1143 = scmp.lt.s32.totalorder %s1142, 3
        %s1144 = scalar_select %p1143, %s1142, 3
        %p1145 = scmp.lt.s32.totalorder %s21, 0
        %s1146 = scalar_select %p1145, %s21, 0
        %s1147 = sadd.s32 %s1146, %s1144
        %s1148 = smul.addr %s1147, 4
        %s1149 = scalar_lea.vmem %s4, %s1148
        // Predicated region
        $region49: #{_lambda_.3} parent=35 // pred_check
          %p1150 = pneg %p146
        $region50: #{_lambda_.3} parent=35 // pred_check_branch
          %1152 = sbr.rel (%p1150) target = $region52
        $region51: #{_lambda_.3} parent=35 // pred_region
          %s1153 = ssub.s32 %s22, 1
          %p1154 = scmp.gt.s32.totalorder %s1153, 0
          %s1155 = scalar_select %p1154, %s1153, 0
          %s1156 = smul.u32 4, %s1155
        $region52: #{_lambda_.3} parent=35 // pred_fallthru
          _
      $region36: #{_lambda_.3} parent=5 // pred_fallthru
        _
      %p1157 = scmp.le.s32.totalorder 2, %s12
      // Predicated region
      $region53: #{_lambda_.3} parent=5 // pred_check
        %p1158 = pneg %p1157
      $region54: #{_lambda_.3} parent=5 // pred_check_branch
        %1160 = sbr.rel (%p1158) target = $region56
      $region55: #{_lambda_.3} parent=5 // pred_region
        %s1161 = ssub.s32 %s12, 2
        // Predicated region
        $region57: #{_lambda_.3} parent=55 // pred_check
          %p1162 = pneg %p152
        $region58: #{_lambda_.3} parent=55 // pred_check_branch
          %1164 = sbr.rel (%p1162) target = $region60
        $region59: #{_lambda_.3} parent=55 // pred_region
          %s1165 = ssub.s32 %s24, 1
          %p1166 = scmp.gt.s32.totalorder %s1165, 0
          %s1167 = scalar_select %p1166, %s1165, 0
          %s1168 = smul.u32 4, %s1167
          %p1169 = scmp.lt.s32.totalorder %s1168, 3
          %s1170 = scalar_select %p1169, %s1168, 3
          %p1171 = scmp.lt.s32.totalorder %s23, 0
          %s1172 = scalar_select %p1171, %s23, 0
          %s1173 = sadd.s32 %s1172, %s1170
          %s1174 = smul.addr %s1173, 4
          %s1175 = scalar_lea.vmem %s4, %s1174
        $region60: #{_lambda_.3} parent=55 // pred_fallthru
          _
      $region56: #{_lambda_.3} parent=5 // pred_fallthru
        _
    $region6: #{_lambda_.3} parent=1 // loop_footer
      %s16 = sadd.s32 1, %s12
    $region7: #{_lambda_.3} parent=1 // loop_footer_branch
      %11 = sbr.rel target = $region3
    $region8: #{_lambda_.3} parent=1 // loop_exit
      _
    %1176 = vsyncpa [#allocation6], 1
    %s1177 = scalar_lea.sflag [#allocation6], 1
    %1178 = vsyncpa %s1177, 1
    %1179 = vsyncpa [#allocation8], 1

// kernel: _lambda_.2
$region0: #{_lambda_.2}
  #allocation0 [shape = 'u32[]', space=smem, size = 0x4, offset = 0x4, fixed_abs, tag = 'smem constant byte address 0x4 - core index']
  #allocation1 [shape = 'u32[72,128]{1,0:T(1,128)}', space=vmem, size = 0x9000, scoped, tag = 'internal scratch']
  #allocation2 [shape = 'f32[4,8,512]{2,1,0:T(8,128)}', space=vmem, size = 0x10000, scoped, tag = 'scratch operand']
  #allocation3 [shape = 'f32[8,128]{1,0:T(8,128)}', space=vmem, size = 0x1000, scoped, tag = 'scratch operand']
  #allocation4 [shape = 'f32[8,128]{1,0:T(8,128)}', space=vmem, size = 0x1000, scoped, tag = 'scratch operand']
  %s0 = inlined_call_operand.vmem [shape: bf16[8,8,128], index: 0, kind: input, shape index: {}]
  %s1 = inlined_call_operand.hbm [shape: bf16[128,512], index: 1, kind: input, shape index: {}]
  %s2 = inlined_call_operand.hbm [shape: bf16[128,512], index: 2, kind: input, shape index: {}]
  %s3 = inlined_call_operand.vmem [shape: f32[1,512], index: 3, kind: input, shape index: {}]
  %s4 = inlined_call_operand.vmem [shape: bf16[8,8,128], index: 4, kind: output, shape index: {}]
  %s5 = sld [smem:[#allocation0]]
  $region61: #{_lambda_.2} parent=0
    _
  %s7 = ssub.s32 1, %s5
  %s8 = scalar_select 0, %s7, %s5
  $region1: #{_lambda_.2} parent=0
    #allocation5 [shape = 'u8[131072]{0}', space=vmem, size = 0x20000, scoped, tag = 'input window, operand 1, single buffered']
    #allocation6 [shape = 's32[2]{0}', space=sflag, size = 0x8, scoped, tag = 'scoped memory for _lambda_.2']
    #allocation7 [shape = 'u8[131072]{0}', space=vmem, size = 0x20000, scoped, tag = 'input window, operand 2, single buffered']
    #allocation8 [shape = 's32[1]{0}', space=sflag, size = 0x4, scoped, tag = 'scoped memory for _lambda_.2']
    %9 = vsyncpa [#allocation6], 0
    %10 = vsyncpa [#allocation8], 0
    loop: start=0, step=1, limit=4
    $region2: #{_lambda_.2} parent=1 // loop_pre_header
      _
    $region3: #{_lambda_.2} parent=1 // loop_header
      %s12 = sphi 0, %s16
      %p13 = scmp.ge.s32.totalorder %s12, 4
      %s19 = sphi 0, %s31
      %s20 = sphi 0, %s27
      %s21 = sphi 0, %s19
      %s22 = sphi 0, %s20
      %s23 = sphi 0, %s21
      %s24 = sphi 0, %s22
      %s36 = sphi 0, %s38
      %s39 = sphi 0, %s36
      %s40 = sphi 0, %s39
      %s56 = sphi 0, %s40
      %s60 = sphi 0, %s60
      %s62 = sphi 0, %s60
      %s63 = sphi 0, %s62
      %s77 = sphi 0, %s63
      %s81 = sphi 0, %s81
      %s83 = sphi 0, %s81
      %s84 = sphi 0, %s83
      %s98 = sphi 0, %s84
      %s102 = sphi 0, %s102
      %s104 = sphi 0, %s102
      %s105 = sphi 0, %s104
      %s119 = sphi 0, %s105
      %s127 = sphi 0, %s129
      %s130 = sphi 0, %s127
      %s131 = sphi 0, %s130
      %s147 = sphi 0, %s131
    $region4: #{_lambda_.2} parent=1 // loop_header_branch
      %15 = sbr.rel (%p13) target = $region8
    $region5: #{_lambda_.2} parent=1 // loop_body
      %s17 = ssub.s32 %s12, 1
      %s18 = ssub.s32 %s12, 2
      %s25 = sadd.s32 1, %s20
      %p26 = scmp.ge.s32.totalorder %s25, 2
      %s27 = scalar_select %p26, 0, %s25
      %s28 = sadd.s32 1, %s19
      %s29 = scalar_select %p26, %s28, %s19
      %p30 = scmp.ge.s32.totalorder %s29, 1
      %s31 = scalar_select %p30, 0, %s29
      %s32 = ssub.s32 %s20, %s27
      %s33 = ssub.s32 %s19, %s31
      %s34 = sor.u32 %s32, %s33
      %p35 = scmp.eq.s32.totalorder %s34, 0
      %s37 = sadd.s32 %s36, 1
      %s38 = scalar_select %p35, %s36, %s37
      %p41 = pneg %p35
      %p42 = scmp.eq.s32.totalorder %s12, 1
      %p43 = por %p41, %p42
      %p44 = scmp.ne.s32.totalorder %s36, %s39
      %p45 = scmp.eq.s32.totalorder %s12, 0
      %p46 = por %p44, %p45
      %p47 = scmp.ne.s32.totalorder %s36, %s39
      %p48 = scmp.eq.s32.totalorder %s17, 1
      %p49 = por %p47, %p48
      %p50 = scmp.ne.s32.totalorder %s39, %s40
      %p51 = scmp.eq.s32.totalorder %s17, 0
      %p52 = por %p50, %p51
      %p53 = scmp.ne.s32.totalorder %s39, %s40
      %p54 = scmp.eq.s32.totalorder %s18, 1
      %p55 = por %p53, %p54
      %p57 = scmp.ne.s32.totalorder %s40, %s56
      %p58 = scmp.eq.s32.totalorder %s18, 0
      %p59 = por %p57, %p58
      %s61 = sadd.s32 %s60, 1
      %p64 = scmp.eq.s32.totalorder %s12, 1
      %p65 = scmp.ne.s32.totalorder %s60, %s62
      %p66 = scmp.eq.s32.totalorder %s12, 0
      %p67 = por %p65, %p66
      %p68 = scmp.ne.s32.totalorder %s60, %s62
      %p69 = scmp.eq.s32.totalorder %s17, 1
      %p70 = por %p68, %p69
      %p71 = scmp.ne.s32.totalorder %s62, %s63
      %p72 = scmp.eq.s32.totalorder %s17, 0
      %p73 = por %p71, %p72
      %p74 = scmp.ne.s32.totalorder %s62, %s63
      %p75 = scmp.eq.s32.totalorder %s18, 1
      %p76 = por %p74, %p75
      %p78 = scmp.ne.s32.totalorder %s63, %s77
      %p79 = scmp.eq.s32.totalorder %s18, 0
      %p80 = por %p78, %p79
      %s82 = sadd.s32 %s81, 1
      %p85 = scmp.eq.s32.totalorder %s12, 1
      %p86 = scmp.ne.s32.totalorder %s81, %s83
      %p87 = scmp.eq.s32.totalorder %s12, 0
      %p88 = por %p86, %p87
      %p89 = scmp.ne.s32.totalorder %s81, %s83
      %p90 = scmp.eq.s32.totalorder %s17, 1
      %p91 = por %p89, %p90
      %p92 = scmp.ne.s32.totalorder %s83, %s84
      %p93 = scmp.eq.s32.totalorder %s17, 0
      %p94 = por %p92, %p93
      %p95 = scmp.ne.s32.totalorder %s83, %s84
      %p96 = scmp.eq.s32.totalorder %s18, 1
      %p97 = por %p95, %p96
      %p99 = scmp.ne.s32.totalorder %s84, %s98
      %p100 = scmp.eq.s32.totalorder %s18, 0
      %p101 = por %p99, %p100
      %s103 = sadd.s32 %s102, 1
      %p106 = scmp.eq.s32.totalorder %s12, 1
      %p107 = scmp.ne.s32.totalorder %s102, %s104
      %p108 = scmp.eq.s32.totalorder %s12, 0
      %p109 = por %p107, %p108
      %p110 = scmp.ne.s32.totalorder %s102, %s104
      %p111 = scmp.eq.s32.totalorder %s17, 1
      %p112 = por %p110, %p111
      %p113 = scmp.ne.s32.totalorder %s104, %s105
      %p114 = scmp.eq.s32.totalorder %s17, 0
      %p115 = por %p113, %p114
      %p116 = scmp.ne.s32.totalorder %s104, %s105
      %p117 = scmp.eq.s32.totalorder %s18, 1
      %p118 = por %p116, %p117
      %p120 = scmp.ne.s32.totalorder %s105, %s119
      %p121 = scmp.eq.s32.totalorder %s18, 0
      %p122 = por %p120, %p121
      %s123 = ssub.s32 %s20, %s27
      %s124 = ssub.s32 %s19, %s31
      %s125 = sor.u32 %s123, %s124
      %p126 = scmp.eq.s32.totalorder %s125, 0
      %s128 = sadd.s32 %s127, 1
      %s129 = scalar_select %p126, %s127, %s128
      %p132 = pneg %p126
      %p133 = scmp.eq.s32.totalorder %s12, 1
      %p134 = por %p132, %p133
      %p135 = scmp.ne.s32.totalorder %s127, %s130
      %p136 = scmp.eq.s32.totalorder %s12, 0
      %p137 = por %p135, %p136
      %p138 = scmp.ne.s32.totalorder %s127, %s130
      %p139 = scmp.eq.s32.totalorder %s17, 1
      %p140 = por %p138, %p139
      %p141 = scmp.ne.s32.totalorder %s130, %s131
      %p142 = scmp.eq.s32.totalorder %s17, 0
      %p143 = por %p141, %p142
      %p144 = scmp.ne.s32.totalorder %s130, %s131
      %p145 = scmp.eq.s32.totalorder %s18, 1
      %p146 = por %p144, %p145
      %p148 = scmp.ne.s32.totalorder %s131, %s147
      %p149 = scmp.eq.s32.totalorder %s18, 0
      %p150 = por %p148, %p149
      %p151 = scmp.le.s32.totalorder 1, %s12
      %p152 = scmp.lt.s32.totalorder %s12, 3
      %p153 = pnand %p151, %p152
      %p154 = pneg %p153
      // Predicated region
      $region9: #{_lambda_.2} parent=5 // pred_check
        _
      $region10: #{_lambda_.2} parent=5 // pred_check_branch
        %156 = sbr.rel (%p153) target = $region12
      $region11: #{_lambda_.2} parent=5 // pred_region
        %s157 = ssub.s32 %s12, 1
        // Predicated region
        $region13: #{_lambda_.2} parent=11 // pred_check
          %p158 = pneg %p73
        $region14: #{_lambda_.2} parent=11 // pred_check_branch
          %160 = sbr.rel (%p158) target = $region16
        $region15: #{_lambda_.2} parent=11 // pred_region
          %162 = vsyncadd [#allocation6], 0
          %s163 = sshll.u32 %s1, 4
          %s164 = int_to_ptr.hbm [resolvable:$true] %s163
          %s165 = sshll.u32 [#allocation5], 4
          %s166 = int_to_ptr.vmem [resolvable:$true] %s165
          %171 = dma.hbm_to_vmem [thread:$0]  %s164, 4096, %s166, [#allocation6], 256, 256, 16
        $region16: #{_lambda_.2} parent=11 // pred_fallthru
          _
        // Predicated region
        $region17: #{_lambda_.2} parent=11 // pred_check
          %p172 = pneg %p94
        $region18: #{_lambda_.2} parent=11 // pred_check_branch
          %174 = sbr.rel (%p172) target = $region20
        $region19: #{_lambda_.2} parent=11 // pred_region
          %176 = vsyncadd [#allocation8], 0
          %s177 = sshll.u32 %s2, 4
          %s178 = int_to_ptr.hbm [resolvable:$true] %s177
          %s179 = sshll.u32 [#allocation7], 4
          %s180 = int_to_ptr.vmem [resolvable:$true] %s179
          %185 = dma.hbm_to_vmem [thread:$0]  %s178, 4096, %s180, [#allocation8], 256, 256, 16
        $region20: #{_lambda_.2} parent=11 // pred_fallthru
          _
        // Predicated region
        $region21: #{_lambda_.2} parent=11 // pred_check
          %p186 = pneg %p115
        $region22: #{_lambda_.2} parent=11 // pred_check_branch
          %188 = sbr.rel (%p186) target = $region24
        $region23: #{_lambda_.2} parent=11 // pred_region
          _
        $region24: #{_lambda_.2} parent=11 // pred_fallthru
          _
      $region12: #{_lambda_.2} parent=5 // pred_fallthru
        _
      %p189 = scmp.lt.s32.totalorder %s12, 2
      // Predicated region
      $region25: #{_lambda_.2} parent=5 // pred_check
        %p190 = pneg %p189
      $region26: #{_lambda_.2} parent=5 // pred_check_branch
        %192 = sbr.rel (%p190) target = $region28
      $region27: #{_lambda_.2} parent=5 // pred_region
        // Predicated region
        $region29: #{_lambda_.2} parent=27 // pred_check
          %p193 = pneg %p46
        $region30: #{_lambda_.2} parent=27 // pred_check_branch
          %195 = sbr.rel (%p193) target = $region32
        $region31: #{_lambda_.2} parent=27 // pred_region
          %s196 = smul.u32 4, %s20
          %p197 = scmp.lt.s32.totalorder %s196, 7
          %s198 = scalar_select %p197, %s196, 7
          %p199 = scmp.lt.s32.totalorder %s19, 0
          %s200 = scalar_select %p199, %s19, 0
          %s201 = sadd.s32 %s200, %s198
          %s202 = smul.addr %s201, 4
          %s203 = scalar_lea.vmem %s0, %s202
          %s204 = smul.u32 4, %s20
        $region32: #{_lambda_.2} parent=27 // pred_fallthru
          _
      $region28: #{_lambda_.2} parent=5 // pred_fallthru
        _
      %p205 = scmp.le.s32.totalorder 1, %s12
      %p206 = scmp.lt.s32.totalorder %s12, 3
      %p207 = pnand %p205, %p206
      %p208 = pneg %p207
      // Predicated region
      $region33: #{_lambda_.2} parent=5 // pred_check
        _
      $region34: #{_lambda_.2} parent=5 // pred_check_branch
        %210 = sbr.rel (%p207) target = $region36
      $region35: #{_lambda_.2} parent=5 // pred_region
        %s211 = ssub.s32 %s12, 1
        // Predicated region
        $region37: #{_lambda_.2} parent=35 // pred_check
          %p212 = pneg %p73
        $region38: #{_lambda_.2} parent=35 // pred_check_branch
          %214 = sbr.rel (%p212) target = $region40
        $region39: #{_lambda_.2} parent=35 // pred_region
          %216 = dma.done [#allocation6], 4096
        $region40: #{_lambda_.2} parent=35 // pred_fallthru
          _
        // Predicated region
        $region41: #{_lambda_.2} parent=35 // pred_check
          %p217 = pneg %p94
        $region42: #{_lambda_.2} parent=35 // pred_check_branch
          %219 = sbr.rel (%p217) target = $region44
        $region43: #{_lambda_.2} parent=35 // pred_region
          %221 = dma.done [#allocation8], 4096
        $region44: #{_lambda_.2} parent=35 // pred_fallthru
          _
        %s222 = smul.u32 4, %s22
        %p223 = scmp.lt.s32.totalorder %s222, 7
        %s224 = scalar_select %p223, %s222, 7
        %p225 = scmp.lt.s32.totalorder %s21, 0
        %s226 = scalar_select %p225, %s21, 0
        %s227 = sadd.s32 %s226, %s224
        %s228 = smul.addr %s227, 4
        %s229 = scalar_lea.vmem %s0, %s228
        %p230 = pneg %p52
        %p231 = pneg %p49
        %p232 = pneg %p73
        %p233 = pneg %p70
        %p234 = pneg %p94
        %p235 = pneg %p91
        %p236 = pneg %p115
        %p237 = pneg %p112
        %p238 = pneg %p143
        %p239 = pneg %p140
        %s240 = smul.u32 4, %s22
        %p241 = scmp.lt.s32.totalorder %s240, 7
        %s242 = scalar_select %p241, %s240, 7
        %p243 = scmp.lt.s32.totalorder %s21, 0
        %s244 = scalar_select %p243, %s21, 0
        %s245 = sadd.s32 %s244, %s242
        %s246 = smul.addr %s245, 4
        %s247 = scalar_lea.vmem %s4, %s246
        %s248 = smul.u32 4, %s22
        %p249 = scmp.lt.s32.totalorder %s248, 7
        %s250 = scalar_select %p249, %s248, 7
        %p251 = scmp.lt.s32.totalorder %s21, 0
        %s252 = scalar_select %p251, %s21, 0
        %s253 = sadd.s32 %s252, %s250
        %s254 = smul.addr %s253, 4
        %s255 = scalar_lea.vmem %s0, %s254
        %s256 = smul.u32 4, %s22
        %s257 = smul.u32 4, %s22
        %p258 = scmp.lt.s32.totalorder %s257, 7
        %s259 = scalar_select %p258, %s257, 7
        %p260 = scmp.lt.s32.totalorder %s21, 0
        %s261 = scalar_select %p260, %s21, 0
        %s262 = sadd.s32 %s261, %s259
        %s263 = smul.addr %s262, 4
        %s264 = scalar_lea.vmem %s4, %s263
        %s265 = smul.u32 4, %s22
        %p266 = scmp.eq.s32.totalorder %s22, 0
        // Predicated region
        $region45: #{_lambda_.2} parent=35 // pred_check
          %p267 = pneg %p266
        $region46: #{_lambda_.2} parent=35 // pred_check_branch
          %269 = sbr.rel (%p267) target = $region48
        $region47: #{_lambda_.2} parent=35 // pred_region
          %270 = vst [vmem:[#allocation3] sm:$0xff] 0.0
          %271 = vst [vmem:[#allocation4] sm:$0xff] 0.0
        $region48: #{_lambda_.2} parent=35 // pred_fallthru
          _
        %v272 = vld [vmem:[#allocation5] sm:$0xff]
        %v273 = vld [vmem:[#allocation5 + $0x8] sm:$0xff]
        %v274 = vld [vmem:[#allocation5 + $0x10] sm:$0xff]
        %v275 = vld [vmem:[#allocation5 + $0x18] sm:$0xff]
        %v276 = vld [vmem:[#allocation5 + $0x20] sm:$0xff]
        %v277 = vld [vmem:[#allocation5 + $0x28] sm:$0xff]
        %v278 = vld [vmem:[#allocation5 + $0x30] sm:$0xff]
        %v279 = vld [vmem:[#allocation5 + $0x38] sm:$0xff]
        %v280 = vld [vmem:[#allocation5 + $0x40] sm:$0xff]
        %v281 = vld [vmem:[#allocation5 + $0x48] sm:$0xff]
        %v282 = vld [vmem:[#allocation5 + $0x50] sm:$0xff]
        %v283 = vld [vmem:[#allocation5 + $0x58] sm:$0xff]
        %v284 = vld [vmem:[#allocation5 + $0x60] sm:$0xff]
        %v285 = vld [vmem:[#allocation5 + $0x68] sm:$0xff]
        %v286 = vld [vmem:[#allocation5 + $0x70] sm:$0xff]
        %v287 = vld [vmem:[#allocation5 + $0x78] sm:$0xff]
        %v288 = vld [vmem:[#allocation5 + $0x80] sm:$0xff]
        %v289 = vld [vmem:[#allocation5 + $0x88] sm:$0xff]
        %v290 = vld [vmem:[#allocation5 + $0x90] sm:$0xff]
        %v291 = vld [vmem:[#allocation5 + $0x98] sm:$0xff]
        %v292 = vld [vmem:[#allocation5 + $0xa0] sm:$0xff]
        %v293 = vld [vmem:[#allocation5 + $0xa8] sm:$0xff]
        %v294 = vld [vmem:[#allocation5 + $0xb0] sm:$0xff]
        %v295 = vld [vmem:[#allocation5 + $0xb8] sm:$0xff]
        %v296 = vld [vmem:[#allocation5 + $0xc0] sm:$0xff]
        %v297 = vld [vmem:[#allocation5 + $0xc8] sm:$0xff]
        %v298 = vld [vmem:[#allocation5 + $0xd0] sm:$0xff]
        %v299 = vld [vmem:[#allocation5 + $0xd8] sm:$0xff]
        %v300 = vld [vmem:[#allocation5 + $0xe0] sm:$0xff]
        %v301 = vld [vmem:[#allocation5 + $0xe8] sm:$0xff]
        %v302 = vld [vmem:[#allocation5 + $0xf0] sm:$0xff]
        %v303 = vld [vmem:[#allocation5 + $0xf8] sm:$0xff]
        %v304 = vld [vmem:[#allocation7] sm:$0xff]
        %v305 = vld [vmem:[#allocation7 + $0x8] sm:$0xff]
        %v306 = vld [vmem:[#allocation7 + $0x10] sm:$0xff]
        %v307 = vld [vmem:[#allocation7 + $0x18] sm:$0xff]
        %v308 = vld [vmem:[#allocation7 + $0x20] sm:$0xff]
        %v309 = vld [vmem:[#allocation7 + $0x28] sm:$0xff]
        %v310 = vld [vmem:[#allocation7 + $0x30] sm:$0xff]
        %v311 = vld [vmem:[#allocation7 + $0x38] sm:$0xff]
        %v312 = vld [vmem:[#allocation7 + $0x40] sm:$0xff]
        %v313 = vld [vmem:[#allocation7 + $0x48] sm:$0xff]
        %v314 = vld [vmem:[#allocation7 + $0x50] sm:$0xff]
        %v315 = vld [vmem:[#allocation7 + $0x58] sm:$0xff]
        %v316 = vld [vmem:[#allocation7 + $0x60] sm:$0xff]
        %v317 = vld [vmem:[#allocation7 + $0x68] sm:$0xff]
        %v318 = vld [vmem:[#allocation7 + $0x70] sm:$0xff]
        %v319 = vld [vmem:[#allocation7 + $0x78] sm:$0xff]
        %v320 = vld [vmem:[#allocation7 + $0x80] sm:$0xff]
        %v321 = vld [vmem:[#allocation7 + $0x88] sm:$0xff]
        %v322 = vld [vmem:[#allocation7 + $0x90] sm:$0xff]
        %v323 = vld [vmem:[#allocation7 + $0x98] sm:$0xff]
        %v324 = vld [vmem:[#allocation7 + $0xa0] sm:$0xff]
        %v325 = vld [vmem:[#allocation7 + $0xa8] sm:$0xff]
        %v326 = vld [vmem:[#allocation7 + $0xb0] sm:$0xff]
        %v327 = vld [vmem:[#allocation7 + $0xb8] sm:$0xff]
        %v328 = vld [vmem:[#allocation7 + $0xc0] sm:$0xff]
        %v329 = vld [vmem:[#allocation7 + $0xc8] sm:$0xff]
        %v330 = vld [vmem:[#allocation7 + $0xd0] sm:$0xff]
        %v331 = vld [vmem:[#allocation7 + $0xd8] sm:$0xff]
        %v332 = vld [vmem:[#allocation7 + $0xe0] sm:$0xff]
        %v333 = vld [vmem:[#allocation7 + $0xe8] sm:$0xff]
        %v334 = vld [vmem:[#allocation7 + $0xf0] sm:$0xff]
        %v335 = vld [vmem:[#allocation7 + $0xf8] sm:$0xff]
        %v336 = vld [vmem:[%s3] sm:$0xf]
        %v337 = vld [vmem:[%s255] sm:$0xf]
        %v338 = vld [vmem:[%s255 + $0x4] sm:$0xf]
        %v339 = vld [vmem:[%s255 + $0x8] sm:$0xf]
        %v340 = vld [vmem:[%s255 + $0xc] sm:$0xf]
        %v342 = vperm.slane %v336, 0
        %v343 = vperm.slane %v336, 1
        %v344 = vperm.slane %v336, 2
        %v345 = vperm.slane %v336, 3
        %v354 = vunpack.c.l.b16 %v337
        %v355 = vunpack.c.l.b16 %v338
        %v356 = vunpack.c.l.b16 %v339
        %v357 = vunpack.c.l.b16 %v340
        %v358 = vpack.c.b16 %v355, %v354
        %v359 = vpack.c.b16 %v357, %v356
        %v394 = vunpack.c.l.b16 %v272
        %v395 = vunpack.c.h.b16 %v272
        %v396 = vunpack.c.l.b16 %v273
        %v397 = vunpack.c.h.b16 %v273
        %v398 = vunpack.c.l.b16 %v274
        %v399 = vunpack.c.h.b16 %v274
        %v400 = vunpack.c.l.b16 %v275
        %v401 = vunpack.c.h.b16 %v275
        %v402 = vunpack.c.l.b16 %v276
        %v403 = vunpack.c.h.b16 %v276
        %v404 = vunpack.c.l.b16 %v277
        %v405 = vunpack.c.h.b16 %v277
        %v406 = vunpack.c.l.b16 %v278
        %v407 = vunpack.c.h.b16 %v278
        %v408 = vunpack.c.l.b16 %v279
        %v409 = vunpack.c.h.b16 %v279
        %v410 = vunpack.c.l.b16 %v280
        %v411 = vunpack.c.h.b16 %v280
        %v412 = vunpack.c.l.b16 %v281
        %v413 = vunpack.c.h.b16 %v281
        %v414 = vunpack.c.l.b16 %v282
        %v415 = vunpack.c.h.b16 %v282
        %v416 = vunpack.c.l.b16 %v283
        %v417 = vunpack.c.h.b16 %v283
        %v418 = vunpack.c.l.b16 %v284
        %v419 = vunpack.c.h.b16 %v284
        %v420 = vunpack.c.l.b16 %v285
        %v421 = vunpack.c.h.b16 %v285
        %v422 = vunpack.c.l.b16 %v286
        %v423 = vunpack.c.h.b16 %v286
        %v424 = vunpack.c.l.b16 %v287
        %v425 = vunpack.c.h.b16 %v287
        %v426 = vunpack.c.l.b16 %v288
        %v427 = vunpack.c.h.b16 %v288
        %v428 = vunpack.c.l.b16 %v289
        %v429 = vunpack.c.h.b16 %v289
        %v430 = vunpack.c.l.b16 %v290
        %v431 = vunpack.c.h.b16 %v290
        %v432 = vunpack.c.l.b16 %v291
        %v433 = vunpack.c.h.b16 %v291
        %v434 = vunpack.c.l.b16 %v292
        %v435 = vunpack.c.h.b16 %v292
        %v436 = vunpack.c.l.b16 %v293
        %v437 = vunpack.c.h.b16 %v293
        %v438 = vunpack.c.l.b16 %v294
        %v439 = vunpack.c.h.b16 %v294
        %v440 = vunpack.c.l.b16 %v295
        %v441 = vunpack.c.h.b16 %v295
        %v442 = vunpack.c.l.b16 %v296
        %v443 = vunpack.c.h.b16 %v296
        %v444 = vunpack.c.l.b16 %v297
        %v445 = vunpack.c.h.b16 %v297
        %v446 = vunpack.c.l.b16 %v298
        %v447 = vunpack.c.h.b16 %v298
        %v448 = vunpack.c.l.b16 %v299
        %v449 = vunpack.c.h.b16 %v299
        %v450 = vunpack.c.l.b16 %v300
        %v451 = vunpack.c.h.b16 %v300
        %v452 = vunpack.c.l.b16 %v301
        %v453 = vunpack.c.h.b16 %v301
        %v454 = vunpack.c.l.b16 %v302
        %v455 = vunpack.c.h.b16 %v302
        %v456 = vunpack.c.l.b16 %v303
        %v457 = vunpack.c.h.b16 %v303
        %v458 = vpack.c.b16 %v398, %v394
        %v459 = vpack.c.b16 %v399, %v395
        %v460 = vpack.c.b16 %v400, %v396
        %v461 = vpack.c.b16 %v401, %v397
        %v462 = vpack.c.b16 %v406, %v402
        %v463 = vpack.c.b16 %v407, %v403
        %v464 = vpack.c.b16 %v408, %v404
        %v465 = vpack.c.b16 %v409, %v405
        %v466 = vpack.c.b16 %v414, %v410
        %v467 = vpack.c.b16 %v415, %v411
        %v468 = vpack.c.b16 %v416, %v412
        %v469 = vpack.c.b16 %v417, %v413
        %v470 = vpack.c.b16 %v422, %v418
        %v471 = vpack.c.b16 %v423, %v419
        %v472 = vpack.c.b16 %v424, %v420
        %v473 = vpack.c.b16 %v425, %v421
        %v474 = vpack.c.b16 %v430, %v426
        %v475 = vpack.c.b16 %v431, %v427
        %v476 = vpack.c.b16 %v432, %v428
        %v477 = vpack.c.b16 %v433, %v429
        %v478 = vpack.c.b16 %v438, %v434
        %v479 = vpack.c.b16 %v439, %v435
        %v480 = vpack.c.b16 %v440, %v436
        %v481 = vpack.c.b16 %v441, %v437
        %v482 = vpack.c.b16 %v446, %v442
        %v483 = vpack.c.b16 %v447, %v443
        %v484 = vpack.c.b16 %v448, %v444
        %v485 = vpack.c.b16 %v449, %v445
        %v486 = vpack.c.b16 %v454, %v450
        %v487 = vpack.c.b16 %v455, %v451
        %v488 = vpack.c.b16 %v456, %v452
        %v489 = vpack.c.b16 %v457, %v453
        %522 = vmatpush.bf16.msra.mxu0 %v486
        %523 = vmatpush.bf16.msra.mxu0 %v482
        %524 = vmatpush.bf16.msra.mxu0 %v478
        %525 = vmatpush.bf16.msra.mxu0 %v474
        %526 = vmatpush.bf16.msra.mxu0 %v470
        %527 = vmatpush.bf16.msra.mxu0 %v466
        %528 = vmatpush.bf16.msra.mxu0 %v462
        %529 = vmatpush.bf16.msra.mxu0 %v458
        %530 = vmatmul.bf16.gmra.mxu0 %v358
        %v531 = vpop.f32.mrf.mxu0
        %v532 = vadd.f32 %v342, %v531
        %v533 = vpop.f32.mrf.mxu0
        %v534 = vadd.f32 %v342, %v533
        %535 = vmatmul.bf16.gmra.mxu0 %v359
        %v536 = vpop.f32.mrf.mxu0
        %v537 = vadd.f32 %v342, %v536
        %v538 = vpop.f32.mrf.mxu0
        %v539 = vadd.f32 %v342, %v538
        %540 = vdwg.mxu0
        %541 = vmatpush.bf16.msra.mxu0 %v487
        %542 = vmatpush.bf16.msra.mxu0 %v483
        %543 = vmatpush.bf16.msra.mxu0 %v479
        %544 = vmatpush.bf16.msra.mxu0 %v475
        %545 = vmatpush.bf16.msra.mxu0 %v471
        %546 = vmatpush.bf16.msra.mxu0 %v467
        %547 = vmatpush.bf16.msra.mxu0 %v463
        %548 = vmatpush.bf16.msra.mxu0 %v459
        %549 = vmatmul.bf16.gmra.mxu0 %v358
        %v550 = vpop.f32.mrf.mxu0
        %v551 = vadd.f32 %v343, %v550
        %v552 = vpop.f32.mrf.mxu0
        %v553 = vadd.f32 %v343, %v552
        %554 = vmatmul.bf16.gmra.mxu0 %v359
        %v555 = vpop.f32.mrf.mxu0
        %v556 = vadd.f32 %v343, %v555
        %v557 = vpop.f32.mrf.mxu0
        %v558 = vadd.f32 %v343, %v557
        %559 = vdwg.mxu0
        %560 = vmatpush.bf16.msra.mxu0 %v488
        %561 = vmatpush.bf16.msra.mxu0 %v484
        %562 = vmatpush.bf16.msra.mxu0 %v480
        %563 = vmatpush.bf16.msra.mxu0 %v476
        %564 = vmatpush.bf16.msra.mxu0 %v472
        %565 = vmatpush.bf16.msra.mxu0 %v468
        %566 = vmatpush.bf16.msra.mxu0 %v464
        %567 = vmatpush.bf16.msra.mxu0 %v460
        %568 = vmatmul.bf16.gmra.mxu0 %v358
        %v569 = vpop.f32.mrf.mxu0
        %v570 = vadd.f32 %v344, %v569
        %v571 = vpop.f32.mrf.mxu0
        %v572 = vadd.f32 %v344, %v571
        %573 = vmatmul.bf16.gmra.mxu0 %v359
        %v574 = vpop.f32.mrf.mxu0
        %v575 = vadd.f32 %v344, %v574
        %v576 = vpop.f32.mrf.mxu0
        %v577 = vadd.f32 %v344, %v576
        %578 = vdwg.mxu0
        %579 = vmatpush.bf16.msra.mxu0 %v489
        %580 = vmatpush.bf16.msra.mxu0 %v485
        %581 = vmatpush.bf16.msra.mxu0 %v481
        %582 = vmatpush.bf16.msra.mxu0 %v477
        %583 = vmatpush.bf16.msra.mxu0 %v473
        %584 = vmatpush.bf16.msra.mxu0 %v469
        %585 = vmatpush.bf16.msra.mxu0 %v465
        %586 = vmatpush.bf16.msra.mxu0 %v461
        %587 = vmatmul.bf16.gmra.mxu0 %v358
        %v588 = vpop.f32.mrf.mxu0
        %v589 = vadd.f32 %v345, %v588
        %v590 = vpop.f32.mrf.mxu0
        %v591 = vadd.f32 %v345, %v590
        %592 = vmatmul.bf16.gmra.mxu0 %v359
        %v593 = vpop.f32.mrf.mxu0
        %v594 = vadd.f32 %v345, %v593
        %v595 = vpop.f32.mrf.mxu0
        %v596 = vadd.f32 %v345, %v595
        %597 = vdwg.mxu0
        %598 = vst [vmem:[#allocation2] sm:$0xff] %v532
        %599 = vst [vmem:[#allocation2 + $0x8] sm:$0xff] %v551
        %600 = vst [vmem:[#allocation2 + $0x10] sm:$0xff] %v570
        %601 = vst [vmem:[#allocation2 + $0x18] sm:$0xff] %v589
        %602 = vst [vmem:[#allocation2 + $0x20] sm:$0xff] %v534
        %603 = vst [vmem:[#allocation2 + $0x28] sm:$0xff] %v553
        %604 = vst [vmem:[#allocation2 + $0x30] sm:$0xff] %v572
        %605 = vst [vmem:[#allocation2 + $0x38] sm:$0xff] %v591
        %606 = vst [vmem:[#allocation2 + $0x40] sm:$0xff] %v537
        %607 = vst [vmem:[#allocation2 + $0x48] sm:$0xff] %v556
        %608 = vst [vmem:[#allocation2 + $0x50] sm:$0xff] %v575
        %609 = vst [vmem:[#allocation2 + $0x58] sm:$0xff] %v594
        %610 = vst [vmem:[#allocation2 + $0x60] sm:$0xff] %v539
        %611 = vst [vmem:[#allocation2 + $0x68] sm:$0xff] %v558
        %612 = vst [vmem:[#allocation2 + $0x70] sm:$0xff] %v577
        %613 = vst [vmem:[#allocation2 + $0x78] sm:$0xff] %v596
        %v614 = vld [vmem:[#allocation2] sm:$0xff]
        %v615 = vld [vmem:[#allocation2 + $0x8] sm:$0xff]
        %v616 = vld [vmem:[#allocation2 + $0x10] sm:$0xff]
        %v617 = vld [vmem:[#allocation2 + $0x18] sm:$0xff]
        %v618 = vld [vmem:[#allocation3] sm:$0xff]
        %v619 = vpack.c.bf16 %v618, %v618
        %v652 = vunpack.c.l.b16 %v304
        %v653 = vunpack.c.h.b16 %v304
        %v654 = vunpack.c.l.b16 %v305
        %v655 = vunpack.c.h.b16 %v305
        %v656 = vunpack.c.l.b16 %v306
        %v657 = vunpack.c.h.b16 %v306
        %v658 = vunpack.c.l.b16 %v307
        %v659 = vunpack.c.h.b16 %v307
        %v660 = vunpack.c.l.b16 %v308
        %v661 = vunpack.c.h.b16 %v308
        %v662 = vunpack.c.l.b16 %v309
        %v663 = vunpack.c.h.b16 %v309
        %v664 = vunpack.c.l.b16 %v310
        %v665 = vunpack.c.h.b16 %v310
        %v666 = vunpack.c.l.b16 %v311
        %v667 = vunpack.c.h.b16 %v311
        %v668 = vunpack.c.l.b16 %v312
        %v669 = vunpack.c.h.b16 %v312
        %v670 = vunpack.c.l.b16 %v313
        %v671 = vunpack.c.h.b16 %v313
        %v672 = vunpack.c.l.b16 %v314
        %v673 = vunpack.c.h.b16 %v314
        %v674 = vunpack.c.l.b16 %v315
        %v675 = vunpack.c.h.b16 %v315
        %v676 = vunpack.c.l.b16 %v316
        %v677 = vunpack.c.h.b16 %v316
        %v678 = vunpack.c.l.b16 %v317
        %v679 = vunpack.c.h.b16 %v317
        %v680 = vunpack.c.l.b16 %v318
        %v681 = vunpack.c.h.b16 %v318
        %v682 = vunpack.c.l.b16 %v319
        %v683 = vunpack.c.h.b16 %v319
        %v684 = vunpack.c.l.b16 %v320
        %v685 = vunpack.c.h.b16 %v320
        %v686 = vunpack.c.l.b16 %v321
        %v687 = vunpack.c.h.b16 %v321
        %v688 = vunpack.c.l.b16 %v322
        %v689 = vunpack.c.h.b16 %v322
        %v690 = vunpack.c.l.b16 %v323
        %v691 = vunpack.c.h.b16 %v323
        %v692 = vunpack.c.l.b16 %v324
        %v693 = vunpack.c.h.b16 %v324
        %v694 = vunpack.c.l.b16 %v325
        %v695 = vunpack.c.h.b16 %v325
        %v696 = vunpack.c.l.b16 %v326
        %v697 = vunpack.c.h.b16 %v326
        %v698 = vunpack.c.l.b16 %v327
        %v699 = vunpack.c.h.b16 %v327
        %v700 = vunpack.c.l.b16 %v328
        %v701 = vunpack.c.h.b16 %v328
        %v702 = vunpack.c.l.b16 %v329
        %v703 = vunpack.c.h.b16 %v329
        %v704 = vunpack.c.l.b16 %v330
        %v705 = vunpack.c.h.b16 %v330
        %v706 = vunpack.c.l.b16 %v331
        %v707 = vunpack.c.h.b16 %v331
        %v708 = vunpack.c.l.b16 %v332
        %v709 = vunpack.c.h.b16 %v332
        %v710 = vunpack.c.l.b16 %v333
        %v711 = vunpack.c.h.b16 %v333
        %v712 = vunpack.c.l.b16 %v334
        %v713 = vunpack.c.h.b16 %v334
        %v714 = vunpack.c.l.b16 %v335
        %v715 = vunpack.c.h.b16 %v335
        %v716 = vpack.c.b16 %v656, %v652
        %v717 = vpack.c.b16 %v657, %v653
        %v718 = vpack.c.b16 %v658, %v654
        %v719 = vpack.c.b16 %v659, %v655
        %v720 = vpack.c.b16 %v664, %v660
        %v721 = vpack.c.b16 %v665, %v661
        %v722 = vpack.c.b16 %v666, %v662
        %v723 = vpack.c.b16 %v667, %v663
        %v724 = vpack.c.b16 %v672, %v668
        %v725 = vpack.c.b16 %v673, %v669
        %v726 = vpack.c.b16 %v674, %v670
        %v727 = vpack.c.b16 %v675, %v671
        %v728 = vpack.c.b16 %v680, %v676
        %v729 = vpack.c.b16 %v681, %v677
        %v730 = vpack.c.b16 %v682, %v678
        %v731 = vpack.c.b16 %v683, %v679
        %v732 = vpack.c.b16 %v688, %v684
        %v733 = vpack.c.b16 %v689, %v685
        %v734 = vpack.c.b16 %v690, %v686
        %v735 = vpack.c.b16 %v691, %v687
        %v736 = vpack.c.b16 %v696, %v692
        %v737 = vpack.c.b16 %v697, %v693
        %v738 = vpack.c.b16 %v698, %v694
        %v739 = vpack.c.b16 %v699, %v695
        %v740 = vpack.c.b16 %v704, %v700
        %v741 = vpack.c.b16 %v705, %v701
        %v742 = vpack.c.b16 %v706, %v702
        %v743 = vpack.c.b16 %v707, %v703
        %v744 = vpack.c.b16 %v712, %v708
        %v745 = vpack.c.b16 %v713, %v709
        %v746 = vpack.c.b16 %v714, %v710
        %v747 = vpack.c.b16 %v715, %v711
        %780 = vmatpush.bf16.msra.mxu0 %v744
        %781 = vmatpush.bf16.msra.mxu0 %v740
        %782 = vmatpush.bf16.msra.mxu0 %v736
        %783 = vmatpush.bf16.msra.mxu0 %v732
        %784 = vmatpush.bf16.msra.mxu0 %v728
        %785 = vmatpush.bf16.msra.mxu0 %v724
        %786 = vmatpush.bf16.msra.mxu0 %v720
        %787 = vmatpush.bf16.msra.mxu0 %v716
        %788 = vmatmul.bf16.gmra.mxu0 %v619
        %v789 = vpop.f32.mrf.mxu0
        %v790 = vadd.f32 0.0, %v789
        %v791 = vpop.f32.mrf.mxu0
        %792 = vdwg.mxu0
        %793 = vmatpush.bf16.msra.mxu0 %v745
        %794 = vmatpush.bf16.msra.mxu0 %v741
        %795 = vmatpush.bf16.msra.mxu0 %v737
        %796 = vmatpush.bf16.msra.mxu0 %v733
        %797 = vmatpush.bf16.msra.mxu0 %v729
        %798 = vmatpush.bf16.msra.mxu0 %v725
        %799 = vmatpush.bf16.msra.mxu0 %v721
        %800 = vmatpush.bf16.msra.mxu0 %v717
        %801 = vmatmul.bf16.gmra.mxu0 %v619
        %v802 = vpop.f32.mrf.mxu0
        %v803 = vadd.f32 0.0, %v802
        %v804 = vpop.f32.mrf.mxu0
        %805 = vdwg.mxu0
        %806 = vmatpush.bf16.msra.mxu0 %v746
        %807 = vmatpush.bf16.msra.mxu0 %v742
        %808 = vmatpush.bf16.msra.mxu0 %v738
        %809 = vmatpush.bf16.msra.mxu0 %v734
        %810 = vmatpush.bf16.msra.mxu0 %v730
        %811 = vmatpush.bf16.msra.mxu0 %v726
        %812 = vmatpush.bf16.msra.mxu0 %v722
        %813 = vmatpush.bf16.msra.mxu0 %v718
        %814 = vmatmul.bf16.gmra.mxu0 %v619
        %v815 = vpop.f32.mrf.mxu0
        %v816 = vadd.f32 0.0, %v815
        %v817 = vpop.f32.mrf.mxu0
        %818 = vdwg.mxu0
        %819 = vmatpush.bf16.msra.mxu0 %v747
        %820 = vmatpush.bf16.msra.mxu0 %v743
        %821 = vmatpush.bf16.msra.mxu0 %v739
        %822 = vmatpush.bf16.msra.mxu0 %v735
        %823 = vmatpush.bf16.msra.mxu0 %v731
        %824 = vmatpush.bf16.msra.mxu0 %v727
        %825 = vmatpush.bf16.msra.mxu0 %v723
        %826 = vmatpush.bf16.msra.mxu0 %v719
        %827 = vmatmul.bf16.gmra.mxu0 %v619
        %v828 = vpop.f32.mrf.mxu0
        %v829 = vadd.f32 0.0, %v828
        %v830 = vpop.f32.mrf.mxu0
        %831 = vdwg.mxu0
        %v832 = vadd.f32 %v614, %v790
        %v833 = vadd.f32 %v615, %v803
        %v834 = vadd.f32 %v616, %v816
        %v835 = vadd.f32 %v617, %v829
        %v836 = vmul.f32 %v832, 0.5
        %v837 = vmul.f32 %v833, 0.5
        %v838 = vmul.f32 %v834, 0.5
        %v839 = vtanh.pop %v836
        %v840 = vtanh.pop %v837
        %v841 = vtanh.pop %v838
        %v842 = vmul.f32 %v839, 0.5
        %v843 = vmul.f32 %v840, 0.5
        %v844 = vmul.f32 %v841, 0.5
        %v845 = vadd.f32 %v842, 0.5
        %v846 = vadd.f32 %v843, 0.5
        %v847 = vadd.f32 %v844, 0.5
        %v848 = vtanh.pop %v835
        %v849 = vld [vmem:[#allocation4] sm:$0xff]
        %v850 = vmul.f32 %v846, %v849
        %v851 = vmul.f32 %v845, %v848
        %v852 = vadd.f32 %v850, %v851
        %v853 = vtanh.pop %v852
        %v854 = vmul.f32 %v847, %v853
        %855 = vst [vmem:[#allocation4] sm:$0xff] %v852
        %856 = vst [vmem:[#allocation3] sm:$0xff] %v854
        %v857 = vld [vmem:[#allocation3] sm:$0xff]
        %v858 = vpack.c.bf16 %v857, %v857
        %859 = vst [vmem:[%s264] sm:$0xf] %v858
        %s860 = scalar_lea.vmem [#allocation2], 32
        %v861 = vld [vmem:[%s860] sm:$0xff]
        %v862 = vld [vmem:[%s860 + $0x8] sm:$0xff]
        %v863 = vld [vmem:[%s860 + $0x10] sm:$0xff]
        %v864 = vld [vmem:[%s860 + $0x18] sm:$0xff]
        %v865 = vld [vmem:[#allocation3] sm:$0xff]
        %v866 = vpack.c.bf16 %v865, %v865
        %867 = vmatpush.bf16.msra.mxu0 %v744
        %868 = vmatpush.bf16.msra.mxu0 %v740
        %869 = vmatpush.bf16.msra.mxu0 %v736
        %870 = vmatpush.bf16.msra.mxu0 %v732
        %871 = vmatpush.bf16.msra.mxu0 %v728
        %872 = vmatpush.bf16.msra.mxu0 %v724
        %873 = vmatpush.bf16.msra.mxu0 %v720
        %874 = vmatpush.bf16.msra.mxu0 %v716
        %875 = vmatmul.bf16.gmra.mxu0 %v866
        %v876 = vpop.f32.mrf.mxu0
        %v877 = vadd.f32 0.0, %v876
        %v878 = vpop.f32.mrf.mxu0
        %879 = vdwg.mxu0
        %880 = vmatpush.bf16.msra.mxu0 %v745
        %881 = vmatpush.bf16.msra.mxu0 %v741
        %882 = vmatpush.bf16.msra.mxu0 %v737
        %883 = vmatpush.bf16.msra.mxu0 %v733
        %884 = vmatpush.bf16.msra.mxu0 %v729
        %885 = vmatpush.bf16.msra.mxu0 %v725
        %886 = vmatpush.bf16.msra.mxu0 %v721
        %887 = vmatpush.bf16.msra.mxu0 %v717
        %888 = vmatmul.bf16.gmra.mxu0 %v866
        %v889 = vpop.f32.mrf.mxu0
        %v890 = vadd.f32 0.0, %v889
        %v891 = vpop.f32.mrf.mxu0
        %892 = vdwg.mxu0
        %893 = vmatpush.bf16.msra.mxu0 %v746
        %894 = vmatpush.bf16.msra.mxu0 %v742
        %895 = vmatpush.bf16.msra.mxu0 %v738
        %896 = vmatpush.bf16.msra.mxu0 %v734
        %897 = vmatpush.bf16.msra.mxu0 %v730
        %898 = vmatpush.bf16.msra.mxu0 %v726
        %899 = vmatpush.bf16.msra.mxu0 %v722
        %900 = vmatpush.bf16.msra.mxu0 %v718
        %901 = vmatmul.bf16.gmra.mxu0 %v866
        %v902 = vpop.f32.mrf.mxu0
        %v903 = vadd.f32 0.0, %v902
        %v904 = vpop.f32.mrf.mxu0
        %905 = vdwg.mxu0
        %906 = vmatpush.bf16.msra.mxu0 %v747
        %907 = vmatpush.bf16.msra.mxu0 %v743
        %908 = vmatpush.bf16.msra.mxu0 %v739
        %909 = vmatpush.bf16.msra.mxu0 %v735
        %910 = vmatpush.bf16.msra.mxu0 %v731
        %911 = vmatpush.bf16.msra.mxu0 %v727
        %912 = vmatpush.bf16.msra.mxu0 %v723
        %913 = vmatpush.bf16.msra.mxu0 %v719
        %914 = vmatmul.bf16.gmra.mxu0 %v866
        %v915 = vpop.f32.mrf.mxu0
        %v916 = vadd.f32 0.0, %v915
        %v917 = vpop.f32.mrf.mxu0
        %918 = vdwg.mxu0
        %v919 = vadd.f32 %v861, %v877
        %v920 = vadd.f32 %v862, %v890
        %v921 = vadd.f32 %v863, %v903
        %v922 = vadd.f32 %v864, %v916
        %v923 = vmul.f32 %v919, 0.5
        %v924 = vmul.f32 %v920, 0.5
        %v925 = vmul.f32 %v921, 0.5
        %v926 = vtanh.pop %v923
        %v927 = vtanh.pop %v924
        %v928 = vtanh.pop %v925
        %v929 = vmul.f32 %v926, 0.5
        %v930 = vmul.f32 %v927, 0.5
        %v931 = vmul.f32 %v928, 0.5
        %v932 = vadd.f32 %v929, 0.5
        %v933 = vadd.f32 %v930, 0.5
        %v934 = vadd.f32 %v931, 0.5
        %v935 = vtanh.pop %v922
        %v936 = vld [vmem:[#allocation4] sm:$0xff]
        %v937 = vmul.f32 %v933, %v936
        %v938 = vmul.f32 %v932, %v935
        %v939 = vadd.f32 %v937, %v938
        %v940 = vtanh.pop %v939
        %v941 = vmul.f32 %v934, %v940
        %942 = vst [vmem:[#allocation4] sm:$0xff] %v939
        %943 = vst [vmem:[#allocation3] sm:$0xff] %v941
        %v944 = vld [vmem:[#allocation3] sm:$0xff]
        %v945 = vpack.c.bf16 %v944, %v944
        %s946 = scalar_lea.vmem %s264, 4
        %947 = vst [vmem:[%s946] sm:$0xf] %v945
        %s948 = scalar_lea.vmem [#allocation2], 64
        %v949 = vld [vmem:[%s948] sm:$0xff]
        %v950 = vld [vmem:[%s948 + $0x8] sm:$0xff]
        %v951 = vld [vmem:[%s948 + $0x10] sm:$0xff]
        %v952 = vld [vmem:[%s948 + $0x18] sm:$0xff]
        %v953 = vld [vmem:[#allocation3] sm:$0xff]
        %v954 = vpack.c.bf16 %v953, %v953
        %955 = vmatpush.bf16.msra.mxu0 %v744
        %956 = vmatpush.bf16.msra.mxu0 %v740
        %957 = vmatpush.bf16.msra.mxu0 %v736
        %958 = vmatpush.bf16.msra.mxu0 %v732
        %959 = vmatpush.bf16.msra.mxu0 %v728
        %960 = vmatpush.bf16.msra.mxu0 %v724
        %961 = vmatpush.bf16.msra.mxu0 %v720
        %962 = vmatpush.bf16.msra.mxu0 %v716
        %963 = vmatmul.bf16.gmra.mxu0 %v954
        %v964 = vpop.f32.mrf.mxu0
        %v965 = vadd.f32 0.0, %v964
        %v966 = vpop.f32.mrf.mxu0
        %967 = vdwg.mxu0
        %968 = vmatpush.bf16.msra.mxu0 %v745
        %969 = vmatpush.bf16.msra.mxu0 %v741
        %970 = vmatpush.bf16.msra.mxu0 %v737
        %971 = vmatpush.bf16.msra.mxu0 %v733
        %972 = vmatpush.bf16.msra.mxu0 %v729
        %973 = vmatpush.bf16.msra.mxu0 %v725
        %974 = vmatpush.bf16.msra.mxu0 %v721
        %975 = vmatpush.bf16.msra.mxu0 %v717
        %976 = vmatmul.bf16.gmra.mxu0 %v954
        %v977 = vpop.f32.mrf.mxu0
        %v978 = vadd.f32 0.0, %v977
        %v979 = vpop.f32.mrf.mxu0
        %980 = vdwg.mxu0
        %981 = vmatpush.bf16.msra.mxu0 %v746
        %982 = vmatpush.bf16.msra.mxu0 %v742
        %983 = vmatpush.bf16.msra.mxu0 %v738
        %984 = vmatpush.bf16.msra.mxu0 %v734
        %985 = vmatpush.bf16.msra.mxu0 %v730
        %986 = vmatpush.bf16.msra.mxu0 %v726
        %987 = vmatpush.bf16.msra.mxu0 %v722
        %988 = vmatpush.bf16.msra.mxu0 %v718
        %989 = vmatmul.bf16.gmra.mxu0 %v954
        %v990 = vpop.f32.mrf.mxu0
        %v991 = vadd.f32 0.0, %v990
        %v992 = vpop.f32.mrf.mxu0
        %993 = vdwg.mxu0
        %994 = vmatpush.bf16.msra.mxu0 %v747
        %995 = vmatpush.bf16.msra.mxu0 %v743
        %996 = vmatpush.bf16.msra.mxu0 %v739
        %997 = vmatpush.bf16.msra.mxu0 %v735
        %998 = vmatpush.bf16.msra.mxu0 %v731
        %999 = vmatpush.bf16.msra.mxu0 %v727
        %1000 = vmatpush.bf16.msra.mxu0 %v723
        %1001 = vmatpush.bf16.msra.mxu0 %v719
        %1002 = vmatmul.bf16.gmra.mxu0 %v954
        %v1003 = vpop.f32.mrf.mxu0
        %v1004 = vadd.f32 0.0, %v1003
        %v1005 = vpop.f32.mrf.mxu0
        %1006 = vdwg.mxu0
        %v1007 = vadd.f32 %v949, %v965
        %v1008 = vadd.f32 %v950, %v978
        %v1009 = vadd.f32 %v951, %v991
        %v1010 = vadd.f32 %v952, %v1004
        %v1011 = vmul.f32 %v1007, 0.5
        %v1012 = vmul.f32 %v1008, 0.5
        %v1013 = vmul.f32 %v1009, 0.5
        %v1014 = vtanh.pop %v1011
        %v1015 = vtanh.pop %v1012
        %v1016 = vtanh.pop %v1013
        %v1017 = vmul.f32 %v1014, 0.5
        %v1018 = vmul.f32 %v1015, 0.5
        %v1019 = vmul.f32 %v1016, 0.5
        %v1020 = vadd.f32 %v1017, 0.5
        %v1021 = vadd.f32 %v1018, 0.5
        %v1022 = vadd.f32 %v1019, 0.5
        %v1023 = vtanh.pop %v1010
        %v1024 = vld [vmem:[#allocation4] sm:$0xff]
        %v1025 = vmul.f32 %v1021, %v1024
        %v1026 = vmul.f32 %v1020, %v1023
        %v1027 = vadd.f32 %v1025, %v1026
        %v1028 = vtanh.pop %v1027
        %v1029 = vmul.f32 %v1022, %v1028
        %1030 = vst [vmem:[#allocation4] sm:$0xff] %v1027
        %1031 = vst [vmem:[#allocation3] sm:$0xff] %v1029
        %v1032 = vld [vmem:[#allocation3] sm:$0xff]
        %v1033 = vpack.c.bf16 %v1032, %v1032
        %s1034 = scalar_lea.vmem %s264, 8
        %1035 = vst [vmem:[%s1034] sm:$0xf] %v1033
        %s1036 = scalar_lea.vmem [#allocation2], 96
        %v1037 = vld [vmem:[%s1036] sm:$0xff]
        %v1038 = vld [vmem:[%s1036 + $0x8] sm:$0xff]
        %v1039 = vld [vmem:[%s1036 + $0x10] sm:$0xff]
        %v1040 = vld [vmem:[%s1036 + $0x18] sm:$0xff]
        %v1041 = vld [vmem:[#allocation3] sm:$0xff]
        %v1042 = vpack.c.bf16 %v1041, %v1041
        %1043 = vmatpush.bf16.msra.mxu0 %v744
        %1044 = vmatpush.bf16.msra.mxu0 %v740
        %1045 = vmatpush.bf16.msra.mxu0 %v736
        %1046 = vmatpush.bf16.msra.mxu0 %v732
        %1047 = vmatpush.bf16.msra.mxu0 %v728
        %1048 = vmatpush.bf16.msra.mxu0 %v724
        %1049 = vmatpush.bf16.msra.mxu0 %v720
        %1050 = vmatpush.bf16.msra.mxu0 %v716
        %1051 = vmatmul.bf16.gmra.mxu0 %v1042
        %v1052 = vpop.f32.mrf.mxu0
        %v1053 = vadd.f32 0.0, %v1052
        %v1054 = vpop.f32.mrf.mxu0
        %1055 = vdwg.mxu0
        %1056 = vmatpush.bf16.msra.mxu0 %v745
        %1057 = vmatpush.bf16.msra.mxu0 %v741
        %1058 = vmatpush.bf16.msra.mxu0 %v737
        %1059 = vmatpush.bf16.msra.mxu0 %v733
        %1060 = vmatpush.bf16.msra.mxu0 %v729
        %1061 = vmatpush.bf16.msra.mxu0 %v725
        %1062 = vmatpush.bf16.msra.mxu0 %v721
        %1063 = vmatpush.bf16.msra.mxu0 %v717
        %1064 = vmatmul.bf16.gmra.mxu0 %v1042
        %v1065 = vpop.f32.mrf.mxu0
        %v1066 = vadd.f32 0.0, %v1065
        %v1067 = vpop.f32.mrf.mxu0
        %1068 = vdwg.mxu0
        %1069 = vmatpush.bf16.msra.mxu0 %v746
        %1070 = vmatpush.bf16.msra.mxu0 %v742
        %1071 = vmatpush.bf16.msra.mxu0 %v738
        %1072 = vmatpush.bf16.msra.mxu0 %v734
        %1073 = vmatpush.bf16.msra.mxu0 %v730
        %1074 = vmatpush.bf16.msra.mxu0 %v726
        %1075 = vmatpush.bf16.msra.mxu0 %v722
        %1076 = vmatpush.bf16.msra.mxu0 %v718
        %1077 = vmatmul.bf16.gmra.mxu0 %v1042
        %v1078 = vpop.f32.mrf.mxu0
        %v1079 = vadd.f32 0.0, %v1078
        %v1080 = vpop.f32.mrf.mxu0
        %1081 = vdwg.mxu0
        %1082 = vmatpush.bf16.msra.mxu0 %v747
        %1083 = vmatpush.bf16.msra.mxu0 %v743
        %1084 = vmatpush.bf16.msra.mxu0 %v739
        %1085 = vmatpush.bf16.msra.mxu0 %v735
        %1086 = vmatpush.bf16.msra.mxu0 %v731
        %1087 = vmatpush.bf16.msra.mxu0 %v727
        %1088 = vmatpush.bf16.msra.mxu0 %v723
        %1089 = vmatpush.bf16.msra.mxu0 %v719
        %1090 = vmatmul.bf16.gmra.mxu0 %v1042
        %v1091 = vpop.f32.mrf.mxu0
        %v1092 = vadd.f32 0.0, %v1091
        %v1093 = vpop.f32.mrf.mxu0
        %1094 = vdwg.mxu0
        %v1095 = vadd.f32 %v1037, %v1053
        %v1096 = vadd.f32 %v1038, %v1066
        %v1097 = vadd.f32 %v1039, %v1079
        %v1098 = vadd.f32 %v1040, %v1092
        %v1099 = vmul.f32 %v1095, 0.5
        %v1100 = vmul.f32 %v1096, 0.5
        %v1101 = vmul.f32 %v1097, 0.5
        %v1102 = vtanh.pop %v1099
        %v1103 = vtanh.pop %v1100
        %v1104 = vtanh.pop %v1101
        %v1105 = vmul.f32 %v1102, 0.5
        %v1106 = vmul.f32 %v1103, 0.5
        %v1107 = vmul.f32 %v1104, 0.5
        %v1108 = vadd.f32 %v1105, 0.5
        %v1109 = vadd.f32 %v1106, 0.5
        %v1110 = vadd.f32 %v1107, 0.5
        %v1111 = vtanh.pop %v1098
        %v1112 = vld [vmem:[#allocation4] sm:$0xff]
        %v1113 = vmul.f32 %v1109, %v1112
        %v1114 = vmul.f32 %v1108, %v1111
        %v1115 = vadd.f32 %v1113, %v1114
        %v1116 = vtanh.pop %v1115
        %v1117 = vmul.f32 %v1110, %v1116
        %1118 = vst [vmem:[#allocation4] sm:$0xff] %v1115
        %1119 = vst [vmem:[#allocation3] sm:$0xff] %v1117
        %v1120 = vld [vmem:[#allocation3] sm:$0xff]
        %v1121 = vpack.c.bf16 %v1120, %v1120
        %s1122 = scalar_lea.vmem %s264, 12
        %1123 = vst [vmem:[%s1122] sm:$0xf] %v1121
        %s1124 = smul.u32 4, %s22
        %p1125 = scmp.lt.s32.totalorder %s1124, 7
        %s1126 = scalar_select %p1125, %s1124, 7
        %p1127 = scmp.lt.s32.totalorder %s21, 0
        %s1128 = scalar_select %p1127, %s21, 0
        %s1129 = sadd.s32 %s1128, %s1126
        %s1130 = smul.addr %s1129, 4
        %s1131 = scalar_lea.vmem %s4, %s1130
        // Predicated region
        $region49: #{_lambda_.2} parent=35 // pred_check
          %p1132 = pneg %p140
        $region50: #{_lambda_.2} parent=35 // pred_check_branch
          %1134 = sbr.rel (%p1132) target = $region52
        $region51: #{_lambda_.2} parent=35 // pred_region
          %s1135 = smul.u32 4, %s22
        $region52: #{_lambda_.2} parent=35 // pred_fallthru
          _
      $region36: #{_lambda_.2} parent=5 // pred_fallthru
        _
      %p1136 = scmp.le.s32.totalorder 2, %s12
      // Predicated region
      $region53: #{_lambda_.2} parent=5 // pred_check
        %p1137 = pneg %p1136
      $region54: #{_lambda_.2} parent=5 // pred_check_branch
        %1139 = sbr.rel (%p1137) target = $region56
      $region55: #{_lambda_.2} parent=5 // pred_region
        %s1140 = ssub.s32 %s12, 2
        // Predicated region
        $region57: #{_lambda_.2} parent=55 // pred_check
          %p1141 = pneg %p146
        $region58: #{_lambda_.2} parent=55 // pred_check_branch
          %1143 = sbr.rel (%p1141) target = $region60
        $region59: #{_lambda_.2} parent=55 // pred_region
          %s1144 = smul.u32 4, %s24
          %p1145 = scmp.lt.s32.totalorder %s1144, 7
          %s1146 = scalar_select %p1145, %s1144, 7
          %p1147 = scmp.lt.s32.totalorder %s23, 0
          %s1148 = scalar_select %p1147, %s23, 0
          %s1149 = sadd.s32 %s1148, %s1146
          %s1150 = smul.addr %s1149, 4
          %s1151 = scalar_lea.vmem %s4, %s1150
        $region60: #{_lambda_.2} parent=55 // pred_fallthru
          _
      $region56: #{_lambda_.2} parent=5 // pred_fallthru
        _
    $region6: #{_lambda_.2} parent=1 // loop_footer
      %s16 = sadd.s32 1, %s12
    $region7: #{_lambda_.2} parent=1 // loop_footer_branch
      %11 = sbr.rel target = $region3
    $region8: #{_lambda_.2} parent=1 // loop_exit
      _
    %1152 = vsyncpa [#allocation6], 1
    %s1153 = scalar_lea.sflag [#allocation6], 1
    %1154 = vsyncpa %s1153, 1
    %1155 = vsyncpa [#allocation8], 1

</llo_original>
